<compile_context>
chip_gen: v7x
topology: tpu7x:2x2x1
jax: 0.10.0
libtpu: 0.0.40
codegen_flags: <defaults>
</compile_context>

<pallas_src>
import functools

import jax
import jax.numpy as jnp
from jax import lax
from jax.experimental import pallas as pl
from jax.experimental.pallas import tpu as pltpu


def _round_up(x, m):
    return (x + m - 1) // m * m


# ---------------------------------------------------------------------------
# Fused kernel: grid = (phase, batch_tile)
#   phase 0: encoder matmul (MXU, bf16 -> f32) + running sum / sum-of-squares,
#            finalized into per-feature (scale, shift) on the last tile.
#   phase 1: BN affine + LeakyReLU + decoder matmul + sigmoid.
# h, the BN statistics and (scale, shift) all live in VMEM scratch.
# ---------------------------------------------------------------------------
def _fused_kernel(x_ref, w1_ref, gamma_ref, beta_ref, w2_ref, b2_ref,   # inputs
                  enc_ref, dec_ref,                                      # outputs
                  h_scr, sum_scr, sq_scr, scale_scr, shift_scr,          # scratch
                  *, batch, eps, slope):
    p = pl.program_id(0)          # phase
    i = pl.program_id(1)          # batch tile
    tile_b = x_ref.shape[0]
    off = pl.multiple_of(i * tile_b, tile_b)

    # ---- phase 0: encoder matmul + BN batch statistics -------------------
    @pl.when(p == 0)
    def _():
        @pl.when(i == 0)
        def _():
            sum_scr[...] = jnp.zeros_like(sum_scr)
            sq_scr[...] = jnp.zeros_like(sq_scr)

        # Encoder Linear on the MXU.  Bias b1 omitted: exactly cancelled by the
        # train-mode BatchNorm mean subtraction.  x cast to bf16 in-kernel.
        h = jnp.dot(x_ref[...].astype(w1_ref.dtype), w1_ref[...],
                    preferred_element_type=jnp.float32)
        h_scr[pl.ds(off, tile_b), :] = h

        # Padded batch rows (if any) are all-zero -> contribute nothing.
        sum_scr[...] += jnp.sum(h, axis=0, keepdims=True)
        sq_scr[...] += jnp.sum(h * h, axis=0, keepdims=True)

        @pl.when(i == pl.num_programs(1) - 1)
        def _():
            inv_n = 1.0 / batch
            mean = sum_scr[...] * inv_n
            var = jnp.maximum(sq_scr[...] * inv_n - mean * mean, 0.0)  # biased
            rstd = lax.rsqrt(var + eps)
            scale = gamma_ref[...] * rstd
            scale_scr[...] = scale
            shift_scr[...] = beta_ref[...] - mean * scale

    # ---- phase 1: BN affine + LeakyReLU + decoder matmul + sigmoid --------
    @pl.when(p == 1)
    def _():
        h = h_scr[pl.ds(off, tile_b), :]
        e = h * scale_scr[...] + shift_scr[...]
        e = jnp.where(e >= 0.0, e, slope * e)                 # LeakyReLU
        enc_ref[...] = e
        d = jnp.dot(e.astype(w2_ref.dtype), w2_ref[...],
                    preferred_element_type=jnp.float32) + b2_ref[...]
        dec_ref[...] = jax.nn.sigmoid(d)


# ---------------------------------------------------------------------------
# Wrapper
# ---------------------------------------------------------------------------
def autoencoder_forward(x, prepared, *, hidden_size, tile_b=512,
                        eps=1e-5, negative_slope=0.01):
    """Returns (encoded [B,H], decoded [B,I]) matching the PyTorch module in
    training mode (BatchNorm uses batch statistics, biased variance)."""
    B, I = x.shape
    w1p, w2p = prepared["w1"], prepared["w2"]
    gamma, beta, b2 = prepared["gamma"], prepared["beta"], prepared["b2"]
    H_pad = w1p.shape[1]
    assert w1p.shape[0] == I and w2p.shape == (H_pad, I)

    tile_b = _round_up(int(max(8, min(tile_b, B))), 8)
    B_pad = _round_up(B, tile_b)
    if B_pad != B:
        # Padded rows are zero; with b1 folded out their h rows are zero, so the
        # BN statistics (divided by the true B) are unaffected.
        x = jnp.pad(x, ((0, B_pad - B), (0, 0)))
    n_tiles = B_pad // tile_b

    if B_pad * H_pad * 4 > 8 * 1024 * 1024:
        # TODO(synk): fall back to a two-pass (h staged in HBM) layout for very
        # large batches instead of refusing.
        raise ValueError("batch too large for the fused single-kernel layout")

    resident = lambda p, i: (0, 0)

    enc_p, dec_p = pl.pallas_call(
        functools.partial(_fused_kernel, batch=B, eps=eps, slope=negative_slope),
        grid=(2, n_tiles),
        in_specs=[
            pl.BlockSpec((tile_b, I), lambda p, i: (i * (1 - p), 0)),  # x (phase 0)
            pl.BlockSpec((I, H_pad), resident),                        # w1 (resident)
            pl.BlockSpec((1, H_pad), resident),                        # gamma
            pl.BlockSpec((1, H_pad), resident),                        # beta
            pl.BlockSpec((H_pad, I), resident),                        # w2 (resident)
            pl.BlockSpec((1, I), resident),                            # b2
        ],
        out_specs=(
            pl.BlockSpec((tile_b, H_pad), lambda p, i: (i * p, 0)),    # encoded
            pl.BlockSpec((tile_b, I), lambda p, i: (i * p, 0)),        # decoded
        ),
        out_shape=(
            jax.ShapeDtypeStruct((B_pad, H_pad), jnp.float32),
            jax.ShapeDtypeStruct((B_pad, I), jnp.float32),
        ),
        scratch_shapes=[
            pltpu.VMEM((B_pad, H_pad), jnp.float32),   # h (never leaves VMEM)
            pltpu.VMEM((1, H_pad), jnp.float32),       # running sum
            pltpu.VMEM((1, H_pad), jnp.float32),       # running sum of squares
            pltpu.VMEM((1, H_pad), jnp.float32),       # BN scale  (gamma * rstd)
            pltpu.VMEM((1, H_pad), jnp.float32),       # BN shift  (beta - mean*scale)
        ],
        compiler_params=pltpu.CompilerParams(
            dimension_semantics=("arbitrary", "arbitrary"),
            vmem_limit_bytes=32 * 1024 * 1024,
        ),
    )(x, w1p, gamma, beta, w2p, b2)

    return enc_p[:B, :hidden_size], dec_p[:B]


def init_params(key, input_size, hidden_size):
    """PyTorch-default-style init: Linear ~ U(-1/sqrt(fan_in), +), BN gamma=1,
    beta=0.  Linear weights stored pre-transposed as [in_features, out_features]."""
    k1, k2, k3, k4 = jax.random.split(key, 4)
    bound1 = 1.0 / jnp.sqrt(input_size)
    bound2 = 1.0 / jnp.sqrt(hidden_size)
    return {
        "w1": jax.random.uniform(k1, (input_size, hidden_size), jnp.float32,
                                 -bound1, bound1),
        "b1": jax.random.uniform(k2, (hidden_size,), jnp.float32,
                                 -bound1, bound1),   # cancelled by train-mode BN
        "gamma": jnp.ones((hidden_size,), jnp.float32),
        "beta": jnp.zeros((hidden_size,), jnp.float32),
        "w2": jax.random.uniform(k3, (hidden_size, input_size), jnp.float32,
                                 -bound2, bound2),
        "b2": jax.random.uniform(k4, (input_size,), jnp.float32,
                                 -bound2, bound2),
    }


def prepare_params(params, *, matmul_dtype=jnp.bfloat16):
    """One-time padding/casting of the weights into kernel-ready layout
    (hoisted out of the forward pass so it is not re-done every call)."""
    I, H = params["w1"].shape
    H_pad = _round_up(H, 128)
    w1p = jnp.zeros((I, H_pad), matmul_dtype).at[:, :H].set(
        params["w1"].astype(matmul_dtype))
    w2p = jnp.zeros((H_pad, I), matmul_dtype).at[:H, :].set(
        params["w2"].astype(matmul_dtype))
    gamma = jnp.zeros((1, H_pad), jnp.float32).at[:, :H].set(
        params["gamma"].reshape(1, H).astype(jnp.float32))
    beta = jnp.zeros((1, H_pad), jnp.float32).at[:, :H].set(
        params["beta"].reshape(1, H).astype(jnp.float32))
    b2 = params["b2"].reshape(1, I).astype(jnp.float32)
    # params["b1"] intentionally dropped: a pre-BatchNorm(train-mode) bias is a no-op.
    return {"w1": w1p, "w2": w2p, "gamma": gamma, "beta": beta, "b2": b2}


if __name__ == "__main__":
    # Shapes consistent with the module: x is [batch, input_size=500].
    batch, input_size, hidden_size = 256, 500, 64

    key = jax.random.PRNGKey(0)
    kx, kp = jax.random.split(key)
    x = jax.random.normal(kx, (batch, input_size), jnp.float32)
    params = init_params(kp, input_size, hidden_size)
    prepared = prepare_params(params)                 # one-time pad/cast

    fwd = jax.jit(functools.partial(autoencoder_forward,
                                    hidden_size=hidden_size, tile_b=128))
    encoded, decoded = fwd(x, prepared)
    jax.block_until_ready((encoded, decoded))

    assert encoded.shape == (batch, hidden_size)
    assert decoded.shape == (batch, input_size)
    assert bool(jnp.all(jnp.isfinite(encoded)))
    assert bool(jnp.all(jnp.isfinite(decoded)))
    assert bool(jnp.all((decoded >= 0.0) & (decoded <= 1.0)))

    # Loose-tolerance check vs. a pure-JAX f32 reference (MXU operands are bf16).
    h = x @ params["w1"] + params["b1"]
    mean = h.mean(axis=0)
    var = ((h - mean) ** 2).mean(axis=0)              # biased, train-mode BN
    e_ref = (h - mean) * lax.rsqrt(var + 1e-5) * params["gamma"] + params["beta"]
    e_ref = jnp.where(e_ref >= 0.0, e_ref, 0.01 * e_ref)
    d_ref = jax.nn.sigmoid(e_ref @ params["w2"] + params["b2"])
    assert float(jnp.max(jnp.abs(encoded - e_ref))) < 1e-1
    assert float(jnp.max(jnp.abs(decoded - d_ref))) < 5e-2

    print("KERNEL_OK")
</pallas_src>

<mosaic_0001>
module attributes {stable_mosaic.version = 11 : i64} {
  func.func @_fused_kernel(%arg0: i32, %arg1: i32, %arg2: memref<128x500xf32, #tpu.memory_space<vmem>>, %arg3: memref<500x128xbf16, #tpu.memory_space<vmem>>, %arg4: memref<1x128xf32, #tpu.memory_space<vmem>>, %arg5: memref<1x128xf32, #tpu.memory_space<vmem>>, %arg6: memref<128x500xbf16, #tpu.memory_space<vmem>>, %arg7: memref<1x500xf32, #tpu.memory_space<vmem>>, %arg8: memref<128x128xf32, #tpu.memory_space<vmem>>, %arg9: memref<128x500xf32, #tpu.memory_space<vmem>>, %arg10: memref<256x128xf32, #tpu.memory_space<vmem>>, %arg11: memref<1x128xf32, #tpu.memory_space<vmem>>, %arg12: memref<1x128xf32, #tpu.memory_space<vmem>>, %arg13: memref<1x128xf32, #tpu.memory_space<vmem>>, %arg14: memref<1x128xf32, #tpu.memory_space<vmem>>) attributes {dimension_semantics = [#tpu.dimension_semantics<arbitrary>, #tpu.dimension_semantics<arbitrary>], iteration_bounds = array<i64: 2, 2>, scalar_prefetch = 0 : i64, scratch_operands = 5 : i64, tpu.core_type = #tpu.core_type<tc>, window_params = [{transform_indices = @transform_0, window_bounds = array<i64: 128, 500>}, {pipeline_mode = #tpu.pipeline_mode<synchronous>, transform_indices = @transform_1, window_bounds = array<i64: 500, 128>}, {pipeline_mode = #tpu.pipeline_mode<synchronous>, transform_indices = @transform_2, window_bounds = array<i64: 1, 128>}, {pipeline_mode = #tpu.pipeline_mode<synchronous>, transform_indices = @transform_3, window_bounds = array<i64: 1, 128>}, {pipeline_mode = #tpu.pipeline_mode<synchronous>, transform_indices = @transform_4, window_bounds = array<i64: 128, 500>}, {pipeline_mode = #tpu.pipeline_mode<synchronous>, transform_indices = @transform_5, window_bounds = array<i64: 1, 500>}, {transform_indices = @transform_6, window_bounds = array<i64: 128, 128>}, {transform_indices = @transform_7, window_bounds = array<i64: 128, 500>}]} {
    %c128_i32 = arith.constant 128 : i32
    %0 = arith.muli %arg1, %c128_i32 : i32
    %1 = tpu.assume_multiple %0, 128 : i32
    %c0_i32 = arith.constant 0 : i32
    %2 = arith.cmpi eq, %arg0, %c0_i32 : i32
    %3 = arith.extui %2 : i1 to i32
    %c0_i32_0 = arith.constant 0 : i32
    %4 = arith.cmpi ne, %3, %c0_i32_0 : i32
    scf.if %4 {
      %c0_i32_2 = arith.constant 0 : i32
      %8 = arith.cmpi eq, %arg1, %c0_i32_2 : i32
      %9 = arith.extui %8 : i1 to i32
      %c0_i32_3 = arith.constant 0 : i32
      %10 = arith.cmpi ne, %9, %c0_i32_3 : i32
      scf.if %10 {
        %cst_20 = arith.constant 0.000000e+00 : f32
        %31 = vector.broadcast %cst_20 : f32 to vector<1x128xf32>
        %c0_21 = arith.constant 0 : index
        %c0_22 = arith.constant 0 : index
        %32 = vector.load %arg11[%c0_21, %c0_22] : memref<1x128xf32, #tpu.memory_space<vmem>>, vector<1x128xf32>
        tpu.vector_store %arg11[%c0_21, %c0_22], %31 {strides = array<i32>} : memref<1x128xf32, #tpu.memory_space<vmem>>, vector<1x128xf32>,
        %cst_23 = arith.constant 0.000000e+00 : f32
        %33 = vector.broadcast %cst_23 : f32 to vector<1x128xf32>
        %c0_24 = arith.constant 0 : index
        %c0_25 = arith.constant 0 : index
        %34 = vector.load %arg12[%c0_24, %c0_25] : memref<1x128xf32, #tpu.memory_space<vmem>>, vector<1x128xf32>
        tpu.vector_store %arg12[%c0_24, %c0_25], %33 {strides = array<i32>} : memref<1x128xf32, #tpu.memory_space<vmem>>, vector<1x128xf32>,
      } else {
      }
      %c0 = arith.constant 0 : index
      %c0_4 = arith.constant 0 : index
      %11 = vector.load %arg2[%c0, %c0_4] : memref<128x500xf32, #tpu.memory_space<vmem>>, vector<128x500xf32>
      %12 = arith.truncf %11 : vector<128x500xf32> to vector<128x500xbf16>
      %c0_5 = arith.constant 0 : index
      %c0_6 = arith.constant 0 : index
      %13 = vector.load %arg3[%c0_5, %c0_6] : memref<500x128xbf16, #tpu.memory_space<vmem>>, vector<500x128xbf16>
      %cst = arith.constant dense<0.000000e+00> : vector<128x128xf32>
      %14 = tpu.matmul %12, %13, %cst {dimension_numbers = #tpu.dot_dimension_numbers<[1], [0], [0], [1], [0, 0, 1, 1], [], []>} : vector<128x500xbf16>, vector<500x128xbf16>, vector<128x128xf32> -> vector<128x128xf32>
      %15 = arith.index_cast %1 : i32 to index
      %c0_7 = arith.constant 0 : index
      %16 = vector.load %arg10[%15, %c0_7] : memref<256x128xf32, #tpu.memory_space<vmem>>, vector<128x128xf32>
      tpu.vector_store %arg10[%15, %c0_7], %14 {strides = array<i32>} : memref<256x128xf32, #tpu.memory_space<vmem>>, vector<128x128xf32>,
      %c0_8 = arith.constant 0 : index
      %c0_9 = arith.constant 0 : index
      %17 = vector.load %arg11[%c0_8, %c0_9] : memref<1x128xf32, #tpu.memory_space<vmem>>, vector<1x128xf32>
      %cst_10 = arith.constant dense<0.000000e+00> : vector<128xf32>
      %18 = vector.multi_reduction <add>, %14, %cst_10 [0] : vector<128x128xf32> to vector<128xf32>
      %19 = vector.shape_cast %18 : vector<128xf32> to vector<1x128xf32>
      %20 = arith.addf %17, %19 : vector<1x128xf32>
      %c0_11 = arith.constant 0 : index
      %c0_12 = arith.constant 0 : index
      %21 = vector.load %arg11[%c0_11, %c0_12] : memref<1x128xf32, #tpu.memory_space<vmem>>, vector<1x128xf32>
      tpu.vector_store %arg11[%c0_11, %c0_12], %20 {strides = array<i32>} : memref<1x128xf32, #tpu.memory_space<vmem>>, vector<1x128xf32>,
      %c0_13 = arith.constant 0 : index
      %c0_14 = arith.constant 0 : index
      %22 = vector.load %arg12[%c0_13, %c0_14] : memref<1x128xf32, #tpu.memory_space<vmem>>, vector<1x128xf32>
      %23 = arith.mulf %14, %14 : vector<128x128xf32>
      %cst_15 = arith.constant dense<0.000000e+00> : vector<128xf32>
      %24 = vector.multi_reduction <add>, %23, %cst_15 [0] : vector<128x128xf32> to vector<128xf32>
      %25 = vector.shape_cast %24 : vector<128xf32> to vector<1x128xf32>
      %26 = arith.addf %22, %25 : vector<1x128xf32>
      %c0_16 = arith.constant 0 : index
      %c0_17 = arith.constant 0 : index
      %27 = vector.load %arg12[%c0_16, %c0_17] : memref<1x128xf32, #tpu.memory_space<vmem>>, vector<1x128xf32>
      tpu.vector_store %arg12[%c0_16, %c0_17], %26 {strides = array<i32>} : memref<1x128xf32, #tpu.memory_space<vmem>>, vector<1x128xf32>,
      %c1_i32_18 = arith.constant 1 : i32
      %28 = arith.cmpi eq, %arg1, %c1_i32_18 : i32
      %29 = arith.extui %28 : i1 to i32
      %c0_i32_19 = arith.constant 0 : i32
      %30 = arith.cmpi ne, %29, %c0_i32_19 : i32
      scf.if %30 {
        %c0_20 = arith.constant 0 : index
        %c0_21 = arith.constant 0 : index
        %31 = vector.load %arg11[%c0_20, %c0_21] : memref<1x128xf32, #tpu.memory_space<vmem>>, vector<1x128xf32>
        %cst_22 = arith.constant 3.906250e-03 : f32
        %32 = vector.broadcast %cst_22 : f32 to vector<1x128xf32>
        %33 = arith.mulf %31, %32 : vector<1x128xf32>
        %c0_23 = arith.constant 0 : index
        %c0_24 = arith.constant 0 : index
        %34 = vector.load %arg12[%c0_23, %c0_24] : memref<1x128xf32, #tpu.memory_space<vmem>>, vector<1x128xf32>
        %cst_25 = arith.constant 3.906250e-03 : f32
        %35 = vector.broadcast %cst_25 : f32 to vector<1x128xf32>
        %36 = arith.mulf %34, %35 : vector<1x128xf32>
        %37 = arith.mulf %33, %33 : vector<1x128xf32>
        %38 = arith.subf %36, %37 : vector<1x128xf32>
        %cst_26 = arith.constant 0.000000e+00 : f32
        %39 = vector.broadcast %cst_26 : f32 to vector<1x128xf32>
        %40 = arith.maximumf %38, %39 : vector<1x128xf32>
        %cst_27 = arith.constant 9.99999974E-6 : f32
        %41 = vector.broadcast %cst_27 : f32 to vector<1x128xf32>
        %42 = arith.addf %40, %41 : vector<1x128xf32>
        %43 = math.rsqrt %42 : vector<1x128xf32>
        %c0_28 = arith.constant 0 : index
        %c0_29 = arith.constant 0 : index
        %44 = vector.load %arg4[%c0_28, %c0_29] : memref<1x128xf32, #tpu.memory_space<vmem>>, vector<1x128xf32>
        %45 = arith.mulf %44, %43 : vector<1x128xf32>
        %c0_30 = arith.constant 0 : index
        %c0_31 = arith.constant 0 : index
        %46 = vector.load %arg13[%c0_30, %c0_31] : memref<1x128xf32, #tpu.memory_space<vmem>>, vector<1x128xf32>
        tpu.vector_store %arg13[%c0_30, %c0_31], %45 {strides = array<i32>} : memref<1x128xf32, #tpu.memory_space<vmem>>, vector<1x128xf32>,
        %c0_32 = arith.constant 0 : index
        %c0_33 = arith.constant 0 : index
        %47 = vector.load %arg5[%c0_32, %c0_33] : memref<1x128xf32, #tpu.memory_space<vmem>>, vector<1x128xf32>
        %48 = arith.mulf %33, %45 : vector<1x128xf32>
        %49 = arith.subf %47, %48 : vector<1x128xf32>
        %c0_34 = arith.constant 0 : index
        %c0_35 = arith.constant 0 : index
        %50 = vector.load %arg14[%c0_34, %c0_35] : memref<1x128xf32, #tpu.memory_space<vmem>>, vector<1x128xf32>
        tpu.vector_store %arg14[%c0_34, %c0_35], %49 {strides = array<i32>} : memref<1x128xf32, #tpu.memory_space<vmem>>, vector<1x128xf32>,
      } else {
      }
    } else {
    }
    %c1_i32 = arith.constant 1 : i32
    %5 = arith.cmpi eq, %arg0, %c1_i32 : i32
    %6 = arith.extui %5 : i1 to i32
    %c0_i32_1 = arith.constant 0 : i32
    %7 = arith.cmpi ne, %6, %c0_i32_1 : i32
    scf.if %7 {
      %8 = arith.index_cast %1 : i32 to index
      %c0 = arith.constant 0 : index
      %9 = vector.load %arg10[%8, %c0] : memref<256x128xf32, #tpu.memory_space<vmem>>, vector<128x128xf32>
      %c0_2 = arith.constant 0 : index
      %c0_3 = arith.constant 0 : index
      %10 = vector.load %arg13[%c0_2, %c0_3] : memref<1x128xf32, #tpu.memory_space<vmem>>, vector<1x128xf32>
      %11 = vector.broadcast %10 : vector<1x128xf32> to vector<128x128xf32>
      %12 = arith.mulf %9, %11 : vector<128x128xf32>
      %c0_4 = arith.constant 0 : index
      %c0_5 = arith.constant 0 : index
      %13 = vector.load %arg14[%c0_4, %c0_5] : memref<1x128xf32, #tpu.memory_space<vmem>>, vector<1x128xf32>
      %14 = vector.broadcast %13 : vector<1x128xf32> to vector<128x128xf32>
      %15 = arith.addf %12, %14 : vector<128x128xf32>
      %cst = arith.constant 0.000000e+00 : f32
      %16 = vector.broadcast %cst : f32 to vector<128x128xf32>
      %17 = arith.cmpf oge, %15, %16 : vector<128x128xf32>
      %cst_6 = arith.constant 0.00999999977 : f32
      %18 = vector.broadcast %cst_6 : f32 to vector<128x128xf32>
      %19 = arith.mulf %18, %15 : vector<128x128xf32>
      %20 = arith.select %17, %15, %19 : vector<128x128xi1>, vector<128x128xf32>
      %c0_7 = arith.constant 0 : index
      %c0_8 = arith.constant 0 : index
      %21 = vector.load %arg8[%c0_7, %c0_8] : memref<128x128xf32, #tpu.memory_space<vmem>>, vector<128x128xf32>
      tpu.vector_store %arg8[%c0_7, %c0_8], %20 {strides = array<i32>} : memref<128x128xf32, #tpu.memory_space<vmem>>, vector<128x128xf32>,
      %22 = arith.truncf %20 : vector<128x128xf32> to vector<128x128xbf16>
      %c0_9 = arith.constant 0 : index
      %c0_10 = arith.constant 0 : index
      %23 = vector.load %arg6[%c0_9, %c0_10] : memref<128x500xbf16, #tpu.memory_space<vmem>>, vector<128x500xbf16>
      %cst_11 = arith.constant dense<0.000000e+00> : vector<128x500xf32>
      %24 = tpu.matmul %22, %23, %cst_11 {dimension_numbers = #tpu.dot_dimension_numbers<[1], [0], [0], [1], [0, 0, 1, 1], [], []>} : vector<128x128xbf16>, vector<128x500xbf16>, vector<128x500xf32> -> vector<128x500xf32>
      %c0_12 = arith.constant 0 : index
      %c0_13 = arith.constant 0 : index
      %25 = vector.load %arg7[%c0_12, %c0_13] : memref<1x500xf32, #tpu.memory_space<vmem>>, vector<1x500xf32>
      %26 = vector.broadcast %25 : vector<1x500xf32> to vector<128x500xf32>
      %27 = arith.addf %24, %26 : vector<128x500xf32>
      %28 = arith.negf %27 : vector<128x500xf32>
      %29 = math.exp %28 : vector<128x500xf32>
      %cst_14 = arith.constant 1.000000e+00 : f32
      %30 = vector.broadcast %cst_14 : f32 to vector<128x500xf32>
      %31 = arith.addf %30, %29 : vector<128x500xf32>
      %32 = arith.divf %30, %31 : vector<128x500xf32>
      %c0_15 = arith.constant 0 : index
      %c0_16 = arith.constant 0 : index
      %33 = vector.load %arg9[%c0_15, %c0_16] : memref<128x500xf32, #tpu.memory_space<vmem>>, vector<128x500xf32>
      tpu.vector_store %arg9[%c0_15, %c0_16], %32 {strides = array<i32>} : memref<128x500xf32, #tpu.memory_space<vmem>>, vector<128x500xf32>,
    } else {
    }
    return
  }
  func.func @transform_0(%arg0: i32, %arg1: i32) -> (i32, i32) {
    %c1_i32 = arith.constant 1 : i32
    %0 = arith.subi %c1_i32, %arg0 : i32
    %1 = arith.muli %arg1, %0 : i32
    %c0_i32 = arith.constant 0 : i32
    %c0_i32_0 = arith.constant 0 : i32
    return %1, %c0_i32 : i32, i32
  }
  func.func @transform_1(%arg0: i32, %arg1: i32) -> (i32, i32) {
    %c0_i32 = arith.constant 0 : i32
    %c0_i32_0 = arith.constant 0 : i32
    %c0_i32_1 = arith.constant 0 : i32
    return %c0_i32, %c0_i32_0 : i32, i32
  }
  func.func @transform_2(%arg0: i32, %arg1: i32) -> (i32, i32) {
    %c0_i32 = arith.constant 0 : i32
    %c0_i32_0 = arith.constant 0 : i32
    %c0_i32_1 = arith.constant 0 : i32
    return %c0_i32, %c0_i32_0 : i32, i32
  }
  func.func @transform_3(%arg0: i32, %arg1: i32) -> (i32, i32) {
    %c0_i32 = arith.constant 0 : i32
    %c0_i32_0 = arith.constant 0 : i32
    %c0_i32_1 = arith.constant 0 : i32
    return %c0_i32, %c0_i32_0 : i32, i32
  }
  func.func @transform_4(%arg0: i32, %arg1: i32) -> (i32, i32) {
    %c0_i32 = arith.constant 0 : i32
    %c0_i32_0 = arith.constant 0 : i32
    %c0_i32_1 = arith.constant 0 : i32
    return %c0_i32, %c0_i32_0 : i32, i32
  }
  func.func @transform_5(%arg0: i32, %arg1: i32) -> (i32, i32) {
    %c0_i32 = arith.constant 0 : i32
    %c0_i32_0 = arith.constant 0 : i32
    %c0_i32_1 = arith.constant 0 : i32
    return %c0_i32, %c0_i32_0 : i32, i32
  }
  func.func @transform_6(%arg0: i32, %arg1: i32) -> (i32, i32) {
    %0 = arith.muli %arg1, %arg0 : i32
    %c0_i32 = arith.constant 0 : i32
    %c0_i32_0 = arith.constant 0 : i32
    return %0, %c0_i32 : i32, i32
  }
  func.func @transform_7(%arg0: i32, %arg1: i32) -> (i32, i32) {
    %0 = arith.muli %arg1, %arg0 : i32
    %c0_i32 = arith.constant 0 : i32
    %c0_i32_0 = arith.constant 0 : i32
    return %0, %c0_i32 : i32, i32
  }
}

</mosaic_0001>

<llo_original>
// kernel: autoencoder_forward.1
$region0: #{autoencoder_forward.1}
  #allocation0 [shape = 'u32[]', space=smem, size = 0x4, offset = 0x4, fixed_abs, tag = 'smem constant byte address 0x4 - core index']
  #allocation1 [shape = 'u32[144,128]{1,0:T(1,128)}', space=vmem, size = 0x12000, scoped, tag = 'internal scratch']
  #allocation2 [shape = 'f32[256,128]{1,0:T(8,128)}', space=vmem, size = 0x20000, scoped, tag = 'scratch operand']
  #allocation3 [shape = 'f32[1,128]{1,0:T(1,128)}', space=vmem, size = 0x200, scoped, tag = 'scratch operand']
  #allocation4 [shape = 'f32[1,128]{1,0:T(1,128)}', space=vmem, size = 0x200, scoped, tag = 'scratch operand']
  #allocation5 [shape = 'f32[1,128]{1,0:T(1,128)}', space=vmem, size = 0x200, scoped, tag = 'scratch operand']
  #allocation6 [shape = 'f32[1,128]{1,0:T(1,128)}', space=vmem, size = 0x200, scoped, tag = 'scratch operand']
  %s0 = inlined_call_operand.vmem [shape: f32[256,500], index: 0, kind: input, shape index: {}]
  %s1 = inlined_call_operand.vmem [shape: bf16[500,128], index: 1, kind: input, shape index: {}]
  %s2 = inlined_call_operand.vmem [shape: f32[1,128], index: 2, kind: input, shape index: {}]
  %s3 = inlined_call_operand.vmem [shape: f32[1,128], index: 3, kind: input, shape index: {}]
  %s4 = inlined_call_operand.vmem [shape: bf16[128,500], index: 4, kind: input, shape index: {}]
  %s5 = inlined_call_operand.vmem [shape: f32[1,500], index: 5, kind: input, shape index: {}]
  %s6 = inlined_call_operand.vmem [shape: f32[256,128], index: 6, kind: output, shape index: {0}]
  %s7 = inlined_call_operand.vmem [shape: f32[256,500], index: 7, kind: output, shape index: {1}]
  %8 = xla_tuple %s6, %s7
  %s9 = sld [smem:[#allocation0]]
  $region81: #{autoencoder_forward.1} parent=0
    _
  %s11 = ssub.s32 1, %s9
  %s12 = scalar_select 0, %s11, %s9
  loop: start=0, step=1, limit=6
  $region2: #{autoencoder_forward.1} parent=0 // loop_pre_header
    _
  $region3: #{autoencoder_forward.1} parent=0 // loop_header
    %s14 = sphi 0, %s18
    %p15 = scmp.ge.s32.totalorder %s14, 6
    %s21 = sphi 0, %s33
    %s22 = sphi 0, %s29
    %s23 = sphi 0, %s21
    %s24 = sphi 0, %s22
    %s25 = sphi 0, %s23
    %s26 = sphi 0, %s24
    %s40 = sphi 0, %s42
    %s43 = sphi 0, %s40
    %s44 = sphi 0, %s43
    %s60 = sphi 0, %s44
    %s64 = sphi 0, %s64
    %s66 = sphi 0, %s64
    %s67 = sphi 0, %s66
    %s81 = sphi 0, %s67
    %s85 = sphi 0, %s85
    %s87 = sphi 0, %s85
    %s88 = sphi 0, %s87
    %s102 = sphi 0, %s88
    %s106 = sphi 0, %s106
    %s108 = sphi 0, %s106
    %s109 = sphi 0, %s108
    %s123 = sphi 0, %s109
    %s127 = sphi 0, %s127
    %s129 = sphi 0, %s127
    %s130 = sphi 0, %s129
    %s144 = sphi 0, %s130
    %s148 = sphi 0, %s148
    %s150 = sphi 0, %s148
    %s151 = sphi 0, %s150
    %s165 = sphi 0, %s151
    %s173 = sphi 0, %s175
    %s176 = sphi 0, %s173
    %s177 = sphi 0, %s176
    %s193 = sphi 0, %s177
    %s201 = sphi 0, %s203
    %s204 = sphi 0, %s201
    %s205 = sphi 0, %s204
    %s221 = sphi 0, %s205
  $region4: #{autoencoder_forward.1} parent=0 // loop_header_branch
    %17 = sbr.rel (%p15) target = $region8
  $region5: #{autoencoder_forward.1} parent=0 // loop_body
    %s19 = ssub.s32 %s14, 1
    %s20 = ssub.s32 %s14, 2
    %s27 = sadd.s32 1, %s22
    %p28 = scmp.ge.s32.totalorder %s27, 2
    %s29 = scalar_select %p28, 0, %s27
    %s30 = sadd.s32 1, %s21
    %s31 = scalar_select %p28, %s30, %s21
    %p32 = scmp.ge.s32.totalorder %s31, 2
    %s33 = scalar_select %p32, 0, %s31
    %s34 = ssub.s32 1, %s21
    %s35 = smul.u32 %s22, %s34
    %s36 = ssub.s32 1, %s33
    %s37 = smul.u32 %s29, %s36
    %s38 = ssub.s32 %s35, %s37
    %p39 = scmp.eq.s32.totalorder %s38, 0
    %s41 = sadd.s32 %s40, 1
    %s42 = scalar_select %p39, %s40, %s41
    %p45 = pneg %p39
    %p46 = scmp.eq.s32.totalorder %s14, 3
    %p47 = por %p45, %p46
    %p48 = scmp.ne.s32.totalorder %s40, %s43
    %p49 = scmp.eq.s32.totalorder %s14, 0
    %p50 = por %p48, %p49
    %p51 = scmp.ne.s32.totalorder %s40, %s43
    %p52 = scmp.eq.s32.totalorder %s19, 3
    %p53 = por %p51, %p52
    %p54 = scmp.ne.s32.totalorder %s43, %s44
    %p55 = scmp.eq.s32.totalorder %s19, 0
    %p56 = por %p54, %p55
    %p57 = scmp.ne.s32.totalorder %s43, %s44
    %p58 = scmp.eq.s32.totalorder %s20, 3
    %p59 = por %p57, %p58
    %p61 = scmp.ne.s32.totalorder %s44, %s60
    %p62 = scmp.eq.s32.totalorder %s20, 0
    %p63 = por %p61, %p62
    %s65 = sadd.s32 %s64, 1
    %p68 = scmp.eq.s32.totalorder %s14, 3
    %p69 = scmp.ne.s32.totalorder %s64, %s66
    %p70 = scmp.eq.s32.totalorder %s14, 0
    %p71 = por %p69, %p70
    %p72 = scmp.ne.s32.totalorder %s64, %s66
    %p73 = scmp.eq.s32.totalorder %s19, 3
    %p74 = por %p72, %p73
    %p75 = scmp.ne.s32.totalorder %s66, %s67
    %p76 = scmp.eq.s32.totalorder %s19, 0
    %p77 = por %p75, %p76
    %p78 = scmp.ne.s32.totalorder %s66, %s67
    %p79 = scmp.eq.s32.totalorder %s20, 3
    %p80 = por %p78, %p79
    %p82 = scmp.ne.s32.totalorder %s67, %s81
    %p83 = scmp.eq.s32.totalorder %s20, 0
    %p84 = por %p82, %p83
    %s86 = sadd.s32 %s85, 1
    %p89 = scmp.eq.s32.totalorder %s14, 3
    %p90 = scmp.ne.s32.totalorder %s85, %s87
    %p91 = scmp.eq.s32.totalorder %s14, 0
    %p92 = por %p90, %p91
    %p93 = scmp.ne.s32.totalorder %s85, %s87
    %p94 = scmp.eq.s32.totalorder %s19, 3
    %p95 = por %p93, %p94
    %p96 = scmp.ne.s32.totalorder %s87, %s88
    %p97 = scmp.eq.s32.totalorder %s19, 0
    %p98 = por %p96, %p97
    %p99 = scmp.ne.s32.totalorder %s87, %s88
    %p100 = scmp.eq.s32.totalorder %s20, 3
    %p101 = por %p99, %p100
    %p103 = scmp.ne.s32.totalorder %s88, %s102
    %p104 = scmp.eq.s32.totalorder %s20, 0
    %p105 = por %p103, %p104
    %s107 = sadd.s32 %s106, 1
    %p110 = scmp.eq.s32.totalorder %s14, 3
    %p111 = scmp.ne.s32.totalorder %s106, %s108
    %p112 = scmp.eq.s32.totalorder %s14, 0
    %p113 = por %p111, %p112
    %p114 = scmp.ne.s32.totalorder %s106, %s108
    %p115 = scmp.eq.s32.totalorder %s19, 3
    %p116 = por %p114, %p115
    %p117 = scmp.ne.s32.totalorder %s108, %s109
    %p118 = scmp.eq.s32.totalorder %s19, 0
    %p119 = por %p117, %p118
    %p120 = scmp.ne.s32.totalorder %s108, %s109
    %p121 = scmp.eq.s32.totalorder %s20, 3
    %p122 = por %p120, %p121
    %p124 = scmp.ne.s32.totalorder %s109, %s123
    %p125 = scmp.eq.s32.totalorder %s20, 0
    %p126 = por %p124, %p125
    %s128 = sadd.s32 %s127, 1
    %p131 = scmp.eq.s32.totalorder %s14, 3
    %p132 = scmp.ne.s32.totalorder %s127, %s129
    %p133 = scmp.eq.s32.totalorder %s14, 0
    %p134 = por %p132, %p133
    %p135 = scmp.ne.s32.totalorder %s127, %s129
    %p136 = scmp.eq.s32.totalorder %s19, 3
    %p137 = por %p135, %p136
    %p138 = scmp.ne.s32.totalorder %s129, %s130
    %p139 = scmp.eq.s32.totalorder %s19, 0
    %p140 = por %p138, %p139
    %p141 = scmp.ne.s32.totalorder %s129, %s130
    %p142 = scmp.eq.s32.totalorder %s20, 3
    %p143 = por %p141, %p142
    %p145 = scmp.ne.s32.totalorder %s130, %s144
    %p146 = scmp.eq.s32.totalorder %s20, 0
    %p147 = por %p145, %p146
    %s149 = sadd.s32 %s148, 1
    %p152 = scmp.eq.s32.totalorder %s14, 3
    %p153 = scmp.ne.s32.totalorder %s148, %s150
    %p154 = scmp.eq.s32.totalorder %s14, 0
    %p155 = por %p153, %p154
    %p156 = scmp.ne.s32.totalorder %s148, %s150
    %p157 = scmp.eq.s32.totalorder %s19, 3
    %p158 = por %p156, %p157
    %p159 = scmp.ne.s32.totalorder %s150, %s151
    %p160 = scmp.eq.s32.totalorder %s19, 0
    %p161 = por %p159, %p160
    %p162 = scmp.ne.s32.totalorder %s150, %s151
    %p163 = scmp.eq.s32.totalorder %s20, 3
    %p164 = por %p162, %p163
    %p166 = scmp.ne.s32.totalorder %s151, %s165
    %p167 = scmp.eq.s32.totalorder %s20, 0
    %p168 = por %p166, %p167
    %s169 = smul.u32 %s22, %s21
    %s170 = smul.u32 %s29, %s33
    %s171 = ssub.s32 %s169, %s170
    %p172 = scmp.eq.s32.totalorder %s171, 0
    %s174 = sadd.s32 %s173, 1
    %s175 = scalar_select %p172, %s173, %s174
    %p178 = pneg %p172
    %p179 = scmp.eq.s32.totalorder %s14, 3
    %p180 = por %p178, %p179
    %p181 = scmp.ne.s32.totalorder %s173, %s176
    %p182 = scmp.eq.s32.totalorder %s14, 0
    %p183 = por %p181, %p182
    %p184 = scmp.ne.s32.totalorder %s173, %s176
    %p185 = scmp.eq.s32.totalorder %s19, 3
    %p186 = por %p184, %p185
    %p187 = scmp.ne.s32.totalorder %s176, %s177
    %p188 = scmp.eq.s32.totalorder %s19, 0
    %p189 = por %p187, %p188
    %p190 = scmp.ne.s32.totalorder %s176, %s177
    %p191 = scmp.eq.s32.totalorder %s20, 3
    %p192 = por %p190, %p191
    %p194 = scmp.ne.s32.totalorder %s177, %s193
    %p195 = scmp.eq.s32.totalorder %s20, 0
    %p196 = por %p194, %p195
    %s197 = smul.u32 %s22, %s21
    %s198 = smul.u32 %s29, %s33
    %s199 = ssub.s32 %s197, %s198
    %p200 = scmp.eq.s32.totalorder %s199, 0
    %s202 = sadd.s32 %s201, 1
    %s203 = scalar_select %p200, %s201, %s202
    %p206 = pneg %p200
    %p207 = scmp.eq.s32.totalorder %s14, 3
    %p208 = por %p206, %p207
    %p209 = scmp.ne.s32.totalorder %s201, %s204
    %p210 = scmp.eq.s32.totalorder %s14, 0
    %p211 = por %p209, %p210
    %p212 = scmp.ne.s32.totalorder %s201, %s204
    %p213 = scmp.eq.s32.totalorder %s19, 3
    %p214 = por %p212, %p213
    %p215 = scmp.ne.s32.totalorder %s204, %s205
    %p216 = scmp.eq.s32.totalorder %s19, 0
    %p217 = por %p215, %p216
    %p218 = scmp.ne.s32.totalorder %s204, %s205
    %p219 = scmp.eq.s32.totalorder %s20, 3
    %p220 = por %p218, %p219
    %p222 = scmp.ne.s32.totalorder %s205, %s221
    %p223 = scmp.eq.s32.totalorder %s20, 0
    %p224 = por %p222, %p223
    %p225 = scmp.le.s32.totalorder 1, %s14
    %p226 = scmp.lt.s32.totalorder %s14, 5
    %p227 = pnand %p225, %p226
    %p228 = pneg %p227
    // Predicated region
    $region9: #{autoencoder_forward.1} parent=5 // pred_check
      _
    $region10: #{autoencoder_forward.1} parent=5 // pred_check_branch
      %230 = sbr.rel (%p227) target = $region12
    $region11: #{autoencoder_forward.1} parent=5 // pred_region
      %s231 = ssub.s32 %s14, 1
      // Predicated region
      $region13: #{autoencoder_forward.1} parent=11 // pred_check
        %p232 = pneg %p77
      $region14: #{autoencoder_forward.1} parent=11 // pred_check_branch
        %234 = sbr.rel (%p232) target = $region16
      $region15: #{autoencoder_forward.1} parent=11 // pred_region
        _
      $region16: #{autoencoder_forward.1} parent=11 // pred_fallthru
        _
      // Predicated region
      $region17: #{autoencoder_forward.1} parent=11 // pred_check
        %p235 = pneg %p98
      $region18: #{autoencoder_forward.1} parent=11 // pred_check_branch
        %237 = sbr.rel (%p235) target = $region20
      $region19: #{autoencoder_forward.1} parent=11 // pred_region
        _
      $region20: #{autoencoder_forward.1} parent=11 // pred_fallthru
        _
      // Predicated region
      $region21: #{autoencoder_forward.1} parent=11 // pred_check
        %p238 = pneg %p119
      $region22: #{autoencoder_forward.1} parent=11 // pred_check_branch
        %240 = sbr.rel (%p238) target = $region24
      $region23: #{autoencoder_forward.1} parent=11 // pred_region
        _
      $region24: #{autoencoder_forward.1} parent=11 // pred_fallthru
        _
      // Predicated region
      $region25: #{autoencoder_forward.1} parent=11 // pred_check
        %p241 = pneg %p140
      $region26: #{autoencoder_forward.1} parent=11 // pred_check_branch
        %243 = sbr.rel (%p241) target = $region28
      $region27: #{autoencoder_forward.1} parent=11 // pred_region
        _
      $region28: #{autoencoder_forward.1} parent=11 // pred_fallthru
        _
      // Predicated region
      $region29: #{autoencoder_forward.1} parent=11 // pred_check
        %p244 = pneg %p161
      $region30: #{autoencoder_forward.1} parent=11 // pred_check_branch
        %246 = sbr.rel (%p244) target = $region32
      $region31: #{autoencoder_forward.1} parent=11 // pred_region
        _
      $region32: #{autoencoder_forward.1} parent=11 // pred_fallthru
        _
    $region12: #{autoencoder_forward.1} parent=5 // pred_fallthru
      _
    %p247 = scmp.lt.s32.totalorder %s14, 4
    // Predicated region
    $region33: #{autoencoder_forward.1} parent=5 // pred_check
      %p248 = pneg %p247
    $region34: #{autoencoder_forward.1} parent=5 // pred_check_branch
      %250 = sbr.rel (%p248) target = $region36
    $region35: #{autoencoder_forward.1} parent=5 // pred_region
      // Predicated region
      $region37: #{autoencoder_forward.1} parent=35 // pred_check
        %p251 = pneg %p50
      $region38: #{autoencoder_forward.1} parent=35 // pred_check_branch
        %253 = sbr.rel (%p251) target = $region40
      $region39: #{autoencoder_forward.1} parent=35 // pred_region
        %s254 = ssub.s32 1, %s21
        %s255 = smul.u32 %s22, %s254
        %s256 = smul.u32 16, %s255
        %p257 = scmp.lt.s32.totalorder %s256, 31
        %s258 = scalar_select %p257, %s256, 31
        %s259 = smul.addr %s258, 4
        %s260 = smul.addr %s259, 8
        %s261 = scalar_lea.vmem %s0, %s260
        %s262 = ssub.s32 1, %s21
        %s263 = smul.u32 %s22, %s262
        %s264 = smul.u32 16, %s263
      $region40: #{autoencoder_forward.1} parent=35 // pred_fallthru
        _
    $region36: #{autoencoder_forward.1} parent=5 // pred_fallthru
      _
    %p265 = scmp.le.s32.totalorder 1, %s14
    %p266 = scmp.lt.s32.totalorder %s14, 5
    %p267 = pnand %p265, %p266
    %p268 = pneg %p267
    // Predicated region
    $region41: #{autoencoder_forward.1} parent=5 // pred_check
      _
    $region42: #{autoencoder_forward.1} parent=5 // pred_check_branch
      %270 = sbr.rel (%p267) target = $region44
    $region43: #{autoencoder_forward.1} parent=5 // pred_region
      %s271 = ssub.s32 %s14, 1
      %s272 = ssub.s32 1, %s23
      %s273 = smul.u32 %s24, %s272
      %s274 = smul.u32 16, %s273
      %p275 = scmp.lt.s32.totalorder %s274, 31
      %s276 = scalar_select %p275, %s274, 31
      %s277 = smul.addr %s276, 4
      %s278 = smul.addr %s277, 8
      %s279 = scalar_lea.vmem %s0, %s278
      %p280 = pneg %p56
      %p281 = pneg %p53
      %p282 = pneg %p77
      %p283 = pneg %p74
      %p284 = pneg %p98
      %p285 = pneg %p95
      %p286 = pneg %p119
      %p287 = pneg %p116
      %p288 = pneg %p140
      %p289 = pneg %p137
      %p290 = pneg %p161
      %p291 = pneg %p158
      %p292 = pneg %p189
      %p293 = pneg %p186
      %s294 = smul.u32 %s24, %s23
      %s295 = smul.u32 16, %s294
      %p296 = scmp.lt.s32.totalorder %s295, 31
      %s297 = scalar_select %p296, %s295, 31
      %s298 = smul.addr %s297, 8
      %s299 = scalar_lea.vmem %s6, %s298
      %p300 = pneg %p217
      %p301 = pneg %p214
      %s302 = smul.u32 %s24, %s23
      %s303 = smul.u32 16, %s302
      %p304 = scmp.lt.s32.totalorder %s303, 31
      %s305 = scalar_select %p304, %s303, 31
      %s306 = smul.addr %s305, 4
      %s307 = smul.addr %s306, 8
      %s308 = scalar_lea.vmem %s7, %s307
      %s309 = ssub.s32 1, %s23
      %s310 = smul.u32 %s24, %s309
      %s311 = smul.u32 16, %s310
      %p312 = scmp.lt.s32.totalorder %s311, 31
      %s313 = scalar_select %p312, %s311, 31
      %s314 = smul.addr %s313, 4
      %s315 = smul.addr %s314, 8
      %s316 = scalar_lea.vmem %s0, %s315
      %s317 = ssub.s32 1, %s23
      %s318 = smul.u32 %s24, %s317
      %s319 = smul.u32 16, %s318
      %s320 = smul.u32 %s24, %s23
      %s321 = smul.u32 16, %s320
      %p322 = scmp.lt.s32.totalorder %s321, 31
      %s323 = scalar_select %p322, %s321, 31
      %s324 = smul.addr %s323, 8
      %s325 = scalar_lea.vmem %s6, %s324
      %s326 = smul.u32 %s24, %s23
      %s327 = smul.u32 16, %s326
      %s328 = smul.u32 %s24, %s23
      %s329 = smul.u32 16, %s328
      %p330 = scmp.lt.s32.totalorder %s329, 31
      %s331 = scalar_select %p330, %s329, 31
      %s332 = smul.addr %s331, 4
      %s333 = smul.addr %s332, 8
      %s334 = scalar_lea.vmem %s7, %s333
      %s335 = smul.u32 %s24, %s23
      %s336 = smul.u32 16, %s335
      %s338 = smul.u32 %s24, 128
      %p339 = scmp.eq.s32.totalorder %s23, 0
      // Predicated region
      $region45: #{autoencoder_forward.1} parent=43 // pred_check
        %p340 = pneg %p339
      $region46: #{autoencoder_forward.1} parent=43 // pred_check_branch
        %342 = sbr.rel (%p340) target = $region48
      $region47: #{autoencoder_forward.1} parent=43 // pred_region
        %p343 = scmp.eq.s32.totalorder %s24, 0
        // Predicated region
        $region49: #{autoencoder_forward.1} parent=47 // pred_check
          %p344 = pneg %p343
        $region50: #{autoencoder_forward.1} parent=47 // pred_check_branch
          %346 = sbr.rel (%p344) target = $region52
        $region51: #{autoencoder_forward.1} parent=47 // pred_region
          %347 = vst [vmem:[#allocation3] sm:$0x1] 0.0
          %348 = vst [vmem:[#allocation4] sm:$0x1] 0.0
        $region52: #{autoencoder_forward.1} parent=47 // pred_fallthru
          _
        %v349 = vld [vmem:[%s316] sm:$0xff]
        %v350 = vld [vmem:[%s316 + $0x8] sm:$0xff]
        %v351 = vld [vmem:[%s316 + $0x10] sm:$0xff]
        %v352 = vld [vmem:[%s316 + $0x18] sm:$0xff]
        %v353 = vld [vmem:[%s316 + $0x20] sm:$0xff]
        %v354 = vld [vmem:[%s316 + $0x28] sm:$0xff]
        %v355 = vld [vmem:[%s316 + $0x30] sm:$0xff]
        %v356 = vld [vmem:[%s316 + $0x38] sm:$0xff]
        %v357 = vld [vmem:[%s316 + $0x40] sm:$0xff]
        %v358 = vld [vmem:[%s316 + $0x48] sm:$0xff]
        %v359 = vld [vmem:[%s316 + $0x50] sm:$0xff]
        %v360 = vld [vmem:[%s316 + $0x58] sm:$0xff]
        %v361 = vld [vmem:[%s316 + $0x60] sm:$0xff]
        %v362 = vld [vmem:[%s316 + $0x68] sm:$0xff]
        %v363 = vld [vmem:[%s316 + $0x70] sm:$0xff]
        %v364 = vld [vmem:[%s316 + $0x78] sm:$0xff]
        %v365 = vld [vmem:[%s316 + $0x80] sm:$0xff]
        %v366 = vld [vmem:[%s316 + $0x88] sm:$0xff]
        %v367 = vld [vmem:[%s316 + $0x90] sm:$0xff]
        %v368 = vld [vmem:[%s316 + $0x98] sm:$0xff]
        %v369 = vld [vmem:[%s316 + $0xa0] sm:$0xff]
        %v370 = vld [vmem:[%s316 + $0xa8] sm:$0xff]
        %v371 = vld [vmem:[%s316 + $0xb0] sm:$0xff]
        %v372 = vld [vmem:[%s316 + $0xb8] sm:$0xff]
        %v373 = vld [vmem:[%s316 + $0xc0] sm:$0xff]
        %v374 = vld [vmem:[%s316 + $0xc8] sm:$0xff]
        %v375 = vld [vmem:[%s316 + $0xd0] sm:$0xff]
        %v376 = vld [vmem:[%s316 + $0xd8] sm:$0xff]
        %v377 = vld [vmem:[%s316 + $0xe0] sm:$0xff]
        %v378 = vld [vmem:[%s316 + $0xe8] sm:$0xff]
        %v379 = vld [vmem:[%s316 + $0xf0] sm:$0xff]
        %v380 = vld [vmem:[%s316 + $0xf8] sm:$0xff]
        %v381 = vld [vmem:[%s316 + $0x100] sm:$0xff]
        %v382 = vld [vmem:[%s316 + $0x108] sm:$0xff]
        %v383 = vld [vmem:[%s316 + $0x110] sm:$0xff]
        %v384 = vld [vmem:[%s316 + $0x118] sm:$0xff]
        %v385 = vld [vmem:[%s316 + $0x120] sm:$0xff]
        %v386 = vld [vmem:[%s316 + $0x128] sm:$0xff]
        %v387 = vld [vmem:[%s316 + $0x130] sm:$0xff]
        %v388 = vld [vmem:[%s316 + $0x138] sm:$0xff]
        %v389 = vld [vmem:[%s316 + $0x140] sm:$0xff]
        %v390 = vld [vmem:[%s316 + $0x148] sm:$0xff]
        %v391 = vld [vmem:[%s316 + $0x150] sm:$0xff]
        %v392 = vld [vmem:[%s316 + $0x158] sm:$0xff]
        %v393 = vld [vmem:[%s316 + $0x160] sm:$0xff]
        %v394 = vld [vmem:[%s316 + $0x168] sm:$0xff]
        %v395 = vld [vmem:[%s316 + $0x170] sm:$0xff]
        %v396 = vld [vmem:[%s316 + $0x178] sm:$0xff]
        %v397 = vld [vmem:[%s316 + $0x180] sm:$0xff]
        %v398 = vld [vmem:[%s316 + $0x188] sm:$0xff]
        %v399 = vld [vmem:[%s316 + $0x190] sm:$0xff]
        %v400 = vld [vmem:[%s316 + $0x198] sm:$0xff]
        %v401 = vld [vmem:[%s316 + $0x1a0] sm:$0xff]
        %v402 = vld [vmem:[%s316 + $0x1a8] sm:$0xff]
        %v403 = vld [vmem:[%s316 + $0x1b0] sm:$0xff]
        %v404 = vld [vmem:[%s316 + $0x1b8] sm:$0xff]
        %v405 = vld [vmem:[%s316 + $0x1c0] sm:$0xff]
        %v406 = vld [vmem:[%s316 + $0x1c8] sm:$0xff]
        %v407 = vld [vmem:[%s316 + $0x1d0] sm:$0xff]
        %v408 = vld [vmem:[%s316 + $0x1d8] sm:$0xff]
        %v409 = vld [vmem:[%s316 + $0x1e0] sm:$0xff]
        %v410 = vld [vmem:[%s316 + $0x1e8] sm:$0xff]
        %v411 = vld [vmem:[%s316 + $0x1f0] sm:$0xff]
        %v412 = vld [vmem:[%s316 + $0x1f8] sm:$0xff]
        %v413 = vpack.c.bf16 %v353, %v349
        %v414 = vpack.c.bf16 %v354, %v350
        %v415 = vpack.c.bf16 %v355, %v351
        %v416 = vpack.c.bf16 %v356, %v352
        %v417 = vpack.c.bf16 %v361, %v357
        %v418 = vpack.c.bf16 %v362, %v358
        %v419 = vpack.c.bf16 %v363, %v359
        %v420 = vpack.c.bf16 %v364, %v360
        %v421 = vpack.c.bf16 %v369, %v365
        %v422 = vpack.c.bf16 %v370, %v366
        %v423 = vpack.c.bf16 %v371, %v367
        %v424 = vpack.c.bf16 %v372, %v368
        %v425 = vpack.c.bf16 %v377, %v373
        %v426 = vpack.c.bf16 %v378, %v374
        %v427 = vpack.c.bf16 %v379, %v375
        %v428 = vpack.c.bf16 %v380, %v376
        %v429 = vpack.c.bf16 %v385, %v381
        %v430 = vpack.c.bf16 %v386, %v382
        %v431 = vpack.c.bf16 %v387, %v383
        %v432 = vpack.c.bf16 %v388, %v384
        %v433 = vpack.c.bf16 %v393, %v389
        %v434 = vpack.c.bf16 %v394, %v390
        %v435 = vpack.c.bf16 %v395, %v391
        %v436 = vpack.c.bf16 %v396, %v392
        %v437 = vpack.c.bf16 %v401, %v397
        %v438 = vpack.c.bf16 %v402, %v398
        %v439 = vpack.c.bf16 %v403, %v399
        %v440 = vpack.c.bf16 %v404, %v400
        %v441 = vpack.c.bf16 %v409, %v405
        %v442 = vpack.c.bf16 %v410, %v406
        %v443 = vpack.c.bf16 %v411, %v407
        %v444 = vpack.c.bf16 %v412, %v408
        %v445 = vld [vmem:[%s1] sm:$0xf]
        %v446 = vld [vmem:[%s1 + $0x4] sm:$0xf]
        %v447 = vld [vmem:[%s1 + $0x8] sm:$0xf]
        %v448 = vld [vmem:[%s1 + $0xc] sm:$0xf]
        %v449 = vld [vmem:[%s1 + $0x10] sm:$0xf]
        %v450 = vld [vmem:[%s1 + $0x14] sm:$0xf]
        %v451 = vld [vmem:[%s1 + $0x18] sm:$0xf]
        %v452 = vld [vmem:[%s1 + $0x1c] sm:$0xf]
        %v453 = vld [vmem:[%s1 + $0x20] sm:$0xf]
        %v454 = vld [vmem:[%s1 + $0x24] sm:$0xf]
        %v455 = vld [vmem:[%s1 + $0x28] sm:$0xf]
        %v456 = vld [vmem:[%s1 + $0x2c] sm:$0xf]
        %v457 = vld [vmem:[%s1 + $0x30] sm:$0xf]
        %v458 = vld [vmem:[%s1 + $0x34] sm:$0xf]
        %v459 = vld [vmem:[%s1 + $0x38] sm:$0xf]
        %v460 = vld [vmem:[%s1 + $0x3c] sm:$0xf]
        %v461 = vld [vmem:[%s1 + $0x40] sm:$0xf]
        %v462 = vld [vmem:[%s1 + $0x44] sm:$0xf]
        %v463 = vld [vmem:[%s1 + $0x48] sm:$0xf]
        %v464 = vld [vmem:[%s1 + $0x4c] sm:$0xf]
        %v465 = vld [vmem:[%s1 + $0x50] sm:$0xf]
        %v466 = vld [vmem:[%s1 + $0x54] sm:$0xf]
        %v467 = vld [vmem:[%s1 + $0x58] sm:$0xf]
        %v468 = vld [vmem:[%s1 + $0x5c] sm:$0xf]
        %v469 = vld [vmem:[%s1 + $0x60] sm:$0xf]
        %v470 = vld [vmem:[%s1 + $0x64] sm:$0xf]
        %v471 = vld [vmem:[%s1 + $0x68] sm:$0xf]
        %v472 = vld [vmem:[%s1 + $0x6c] sm:$0xf]
        %v473 = vld [vmem:[%s1 + $0x70] sm:$0xf]
        %v474 = vld [vmem:[%s1 + $0x74] sm:$0xf]
        %v475 = vld [vmem:[%s1 + $0x78] sm:$0xf]
        %v476 = vld [vmem:[%s1 + $0x7c] sm:$0xf]
        %v477 = vld [vmem:[%s1 + $0x80] sm:$0xf]
        %v478 = vld [vmem:[%s1 + $0x84] sm:$0xf]
        %v479 = vld [vmem:[%s1 + $0x88] sm:$0xf]
        %v480 = vld [vmem:[%s1 + $0x8c] sm:$0xf]
        %v481 = vld [vmem:[%s1 + $0x90] sm:$0xf]
        %v482 = vld [vmem:[%s1 + $0x94] sm:$0xf]
        %v483 = vld [vmem:[%s1 + $0x98] sm:$0xf]
        %v484 = vld [vmem:[%s1 + $0x9c] sm:$0xf]
        %v485 = vld [vmem:[%s1 + $0xa0] sm:$0xf]
        %v486 = vld [vmem:[%s1 + $0xa4] sm:$0xf]
        %v487 = vld [vmem:[%s1 + $0xa8] sm:$0xf]
        %v488 = vld [vmem:[%s1 + $0xac] sm:$0xf]
        %v489 = vld [vmem:[%s1 + $0xb0] sm:$0xf]
        %v490 = vld [vmem:[%s1 + $0xb4] sm:$0xf]
        %v491 = vld [vmem:[%s1 + $0xb8] sm:$0xf]
        %v492 = vld [vmem:[%s1 + $0xbc] sm:$0xf]
        %v493 = vld [vmem:[%s1 + $0xc0] sm:$0xf]
        %v494 = vld [vmem:[%s1 + $0xc4] sm:$0xf]
        %v495 = vld [vmem:[%s1 + $0xc8] sm:$0xf]
        %v496 = vld [vmem:[%s1 + $0xcc] sm:$0xf]
        %v497 = vld [vmem:[%s1 + $0xd0] sm:$0xf]
        %v498 = vld [vmem:[%s1 + $0xd4] sm:$0xf]
        %v499 = vld [vmem:[%s1 + $0xd8] sm:$0xf]
        %v500 = vld [vmem:[%s1 + $0xdc] sm:$0xf]
        %v501 = vld [vmem:[%s1 + $0xe0] sm:$0xf]
        %v502 = vld [vmem:[%s1 + $0xe4] sm:$0xf]
        %v503 = vld [vmem:[%s1 + $0xe8] sm:$0xf]
        %v504 = vld [vmem:[%s1 + $0xec] sm:$0xf]
        %v505 = vld [vmem:[%s1 + $0xf0] sm:$0xf]
        %v506 = vld [vmem:[%s1 + $0xf4] sm:$0xf]
        %v507 = vld [vmem:[%s1 + $0xf8] sm:$0x3]
        %v571 = vunpack.c.l.b16 %v445
        %v572 = vunpack.c.l.b16 %v446
        %v573 = vunpack.c.l.b16 %v447
        %v574 = vunpack.c.l.b16 %v448
        %v575 = vunpack.c.l.b16 %v449
        %v576 = vunpack.c.l.b16 %v450
        %v577 = vunpack.c.l.b16 %v451
        %v578 = vunpack.c.l.b16 %v452
        %v579 = vunpack.c.l.b16 %v453
        %v580 = vunpack.c.l.b16 %v454
        %v581 = vunpack.c.l.b16 %v455
        %v582 = vunpack.c.l.b16 %v456
        %v583 = vunpack.c.l.b16 %v457
        %v584 = vunpack.c.l.b16 %v458
        %v585 = vunpack.c.l.b16 %v459
        %v586 = vunpack.c.l.b16 %v460
        %v587 = vunpack.c.l.b16 %v461
        %v588 = vunpack.c.l.b16 %v462
        %v589 = vunpack.c.l.b16 %v463
        %v590 = vunpack.c.l.b16 %v464
        %v591 = vunpack.c.l.b16 %v465
        %v592 = vunpack.c.l.b16 %v466
        %v593 = vunpack.c.l.b16 %v467
        %v594 = vunpack.c.l.b16 %v468
        %v595 = vunpack.c.l.b16 %v469
        %v596 = vunpack.c.l.b16 %v470
        %v597 = vunpack.c.l.b16 %v471
        %v598 = vunpack.c.l.b16 %v472
        %v599 = vunpack.c.l.b16 %v473
        %v600 = vunpack.c.l.b16 %v474
        %v601 = vunpack.c.l.b16 %v475
        %v602 = vunpack.c.l.b16 %v476
        %v603 = vunpack.c.l.b16 %v477
        %v604 = vunpack.c.l.b16 %v478
        %v605 = vunpack.c.l.b16 %v479
        %v606 = vunpack.c.l.b16 %v480
        %v607 = vunpack.c.l.b16 %v481
        %v608 = vunpack.c.l.b16 %v482
        %v609 = vunpack.c.l.b16 %v483
        %v610 = vunpack.c.l.b16 %v484
        %v611 = vunpack.c.l.b16 %v485
        %v612 = vunpack.c.l.b16 %v486
        %v613 = vunpack.c.l.b16 %v487
        %v614 = vunpack.c.l.b16 %v488
        %v615 = vunpack.c.l.b16 %v489
        %v616 = vunpack.c.l.b16 %v490
        %v617 = vunpack.c.l.b16 %v491
        %v618 = vunpack.c.l.b16 %v492
        %v619 = vunpack.c.l.b16 %v493
        %v620 = vunpack.c.l.b16 %v494
        %v621 = vunpack.c.l.b16 %v495
        %v622 = vunpack.c.l.b16 %v496
        %v623 = vunpack.c.l.b16 %v497
        %v624 = vunpack.c.l.b16 %v498
        %v625 = vunpack.c.l.b16 %v499
        %v626 = vunpack.c.l.b16 %v500
        %v627 = vunpack.c.l.b16 %v501
        %v628 = vunpack.c.l.b16 %v502
        %v629 = vunpack.c.l.b16 %v503
        %v630 = vunpack.c.l.b16 %v504
        %v631 = vunpack.c.l.b16 %v505
        %v632 = vunpack.c.l.b16 %v506
        %v633 = vunpack.c.l.b16 %v507
        %v634 = vpack.c.b16 %v572, %v571
        %v635 = vpack.c.b16 %v574, %v573
        %v636 = vpack.c.b16 %v576, %v575
        %v637 = vpack.c.b16 %v578, %v577
        %v638 = vpack.c.b16 %v580, %v579
        %v639 = vpack.c.b16 %v582, %v581
        %v640 = vpack.c.b16 %v584, %v583
        %v641 = vpack.c.b16 %v586, %v585
        %v642 = vpack.c.b16 %v588, %v587
        %v643 = vpack.c.b16 %v590, %v589
        %v644 = vpack.c.b16 %v592, %v591
        %v645 = vpack.c.b16 %v594, %v593
        %v646 = vpack.c.b16 %v596, %v595
        %v647 = vpack.c.b16 %v598, %v597
        %v648 = vpack.c.b16 %v600, %v599
        %v649 = vpack.c.b16 %v602, %v601
        %v650 = vpack.c.b16 %v604, %v603
        %v651 = vpack.c.b16 %v606, %v605
        %v652 = vpack.c.b16 %v608, %v607
        %v653 = vpack.c.b16 %v610, %v609
        %v654 = vpack.c.b16 %v612, %v611
        %v655 = vpack.c.b16 %v614, %v613
        %v656 = vpack.c.b16 %v616, %v615
        %v657 = vpack.c.b16 %v618, %v617
        %v658 = vpack.c.b16 %v620, %v619
        %v659 = vpack.c.b16 %v622, %v621
        %v660 = vpack.c.b16 %v624, %v623
        %v661 = vpack.c.b16 %v626, %v625
        %v662 = vpack.c.b16 %v628, %v627
        %v663 = vpack.c.b16 %v630, %v629
        %v664 = vpack.c.b16 %v632, %v631
        %v665 = vpack.c.b16 %v633, %v633
        %vm697 = vcmask 949248
        %v699 = vsel %vm697, %v416, 0
        %v702 = vsel %vm697, %v420, 0
        %v705 = vsel %vm697, %v424, 0
        %v708 = vsel %vm697, %v428, 0
        %v711 = vsel %vm697, %v432, 0
        %v714 = vsel %vm697, %v436, 0
        %v717 = vsel %vm697, %v440, 0
        %v720 = vsel %vm697, %v444, 0
        %vm722 = vcmask 1041408
        %v724 = vsel %vm722, %v665, 0
        %726 = vmatprep.subr.bf16.mxu0 0
        %727 = vmatpush1.bf16.msra.mxu0 %v634
        %728 = vmatprep.subr.bf16.mxu0 0
        %729 = vmatpush1.bf16.msra.mxu0 %v635
        %730 = vmatprep.subr.bf16.mxu0 0
        %731 = vmatpush1.bf16.msra.mxu0 %v636
        %732 = vmatprep.subr.bf16.mxu0 0
        %733 = vmatpush1.bf16.msra.mxu0 %v637
        %734 = vmatprep.subr.bf16.mxu0 0
        %735 = vmatpush1.bf16.msra.mxu0 %v638
        %736 = vmatprep.subr.bf16.mxu0 0
        %737 = vmatpush1.bf16.msra.mxu0 %v639
        %738 = vmatprep.subr.bf16.mxu0 0
        %739 = vmatpush1.bf16.msra.mxu0 %v640
        %740 = vmatprep.subr.bf16.mxu0 0
        %741 = vmatpush1.bf16.msra.mxu0 %v641
        %742 = vmatprep.subr.bf16.mxu0 0
        %743 = vmatpush1.bf16.msra.mxu0 %v642
        %744 = vmatprep.subr.bf16.mxu0 0
        %745 = vmatpush1.bf16.msra.mxu0 %v643
        %746 = vmatprep.subr.bf16.mxu0 0
        %747 = vmatpush1.bf16.msra.mxu0 %v644
        %748 = vmatprep.subr.bf16.mxu0 0
        %749 = vmatpush1.bf16.msra.mxu0 %v645
        %750 = vmatprep.subr.bf16.mxu0 0
        %751 = vmatpush1.bf16.msra.mxu0 %v646
        %752 = vmatprep.subr.bf16.mxu0 0
        %753 = vmatpush1.bf16.msra.mxu0 %v647
        %754 = vmatprep.subr.bf16.mxu0 0
        %755 = vmatpush1.bf16.msra.mxu0 %v648
        %756 = vmatprep.subr.bf16.mxu0 0
        %757 = vmatpush1.bf16.msra.mxu0 %v649
        %758 = vmatprep.mubr.bf16.mxu0 %v414
        %759 = vmatmul.mubr.bf16.gmra.mrb[0].mxu0 %v413
        %v760 = vpop.f32.mrb[0].mxu0
        %v761 = vadd.f32 0.0, %v760
        %v762 = vpop.f32.mrb[0].mxu0
        %v763 = vpop.f32.mrb[0].mxu0
        %v764 = vadd.f32 0.0, %v763
        %v765 = vpop.f32.mrb[0].mxu0
        %766 = vmatprep.mubr.bf16.mxu0 %v418
        %767 = vmatmul.mubr.bf16.gmra.mrb[0].mxu0 %v417
        %v768 = vpop.f32.mrb[0].mxu0
        %v769 = vadd.f32 0.0, %v768
        %v770 = vpop.f32.mrb[0].mxu0
        %v771 = vpop.f32.mrb[0].mxu0
        %v772 = vadd.f32 0.0, %v771
        %v773 = vpop.f32.mrb[0].mxu0
        %774 = vmatprep.mubr.bf16.mxu0 %v422
        %775 = vmatmul.mubr.bf16.gmra.mrb[0].mxu0 %v421
        %v776 = vpop.f32.mrb[0].mxu0
        %v777 = vadd.f32 0.0, %v776
        %v778 = vpop.f32.mrb[0].mxu0
        %v779 = vpop.f32.mrb[0].mxu0
        %v780 = vadd.f32 0.0, %v779
        %v781 = vpop.f32.mrb[0].mxu0
        %782 = vmatprep.mubr.bf16.mxu0 %v426
        %783 = vmatmul.mubr.bf16.gmra.mrb[0].mxu0 %v425
        %v784 = vpop.f32.mrb[0].mxu0
        %v785 = vadd.f32 0.0, %v784
        %v786 = vpop.f32.mrb[0].mxu0
        %v787 = vpop.f32.mrb[0].mxu0
        %v788 = vadd.f32 0.0, %v787
        %v789 = vpop.f32.mrb[0].mxu0
        %790 = vmatprep.mubr.bf16.mxu0 %v430
        %791 = vmatmul.mubr.bf16.gmra.mrb[0].mxu0 %v429
        %v792 = vpop.f32.mrb[0].mxu0
        %v793 = vadd.f32 0.0, %v792
        %v794 = vpop.f32.mrb[0].mxu0
        %v795 = vpop.f32.mrb[0].mxu0
        %v796 = vadd.f32 0.0, %v795
        %v797 = vpop.f32.mrb[0].mxu0
        %798 = vmatprep.mubr.bf16.mxu0 %v434
        %799 = vmatmul.mubr.bf16.gmra.mrb[0].mxu0 %v433
        %v800 = vpop.f32.mrb[0].mxu0
        %v801 = vadd.f32 0.0, %v800
        %v802 = vpop.f32.mrb[0].mxu0
        %v803 = vpop.f32.mrb[0].mxu0
        %v804 = vadd.f32 0.0, %v803
        %v805 = vpop.f32.mrb[0].mxu0
        %806 = vmatprep.mubr.bf16.mxu0 %v438
        %807 = vmatmul.mubr.bf16.gmra.mrb[0].mxu0 %v437
        %v808 = vpop.f32.mrb[0].mxu0
        %v809 = vadd.f32 0.0, %v808
        %v810 = vpop.f32.mrb[0].mxu0
        %v811 = vpop.f32.mrb[0].mxu0
        %v812 = vadd.f32 0.0, %v811
        %v813 = vpop.f32.mrb[0].mxu0
        %814 = vmatprep.mubr.bf16.mxu0 %v442
        %815 = vmatmul.mubr.bf16.gmra.mrb[0].mxu0 %v441
        %v816 = vpop.f32.mrb[0].mxu0
        %v817 = vadd.f32 0.0, %v816
        %v818 = vpop.f32.mrb[0].mxu0
        %v819 = vpop.f32.mrb[0].mxu0
        %v820 = vadd.f32 0.0, %v819
        %v821 = vpop.f32.mrb[0].mxu0
        %822 = vdwg.mxu0
        %823 = vmatprep.subr.bf16.mxu0 0
        %824 = vmatpush1.bf16.msra.mxu0 %v650
        %825 = vmatprep.subr.bf16.mxu0 0
        %826 = vmatpush1.bf16.msra.mxu0 %v651
        %827 = vmatprep.subr.bf16.mxu0 0
        %828 = vmatpush1.bf16.msra.mxu0 %v652
        %829 = vmatprep.subr.bf16.mxu0 0
        %830 = vmatpush1.bf16.msra.mxu0 %v653
        %831 = vmatprep.subr.bf16.mxu0 0
        %832 = vmatpush1.bf16.msra.mxu0 %v654
        %833 = vmatprep.subr.bf16.mxu0 0
        %834 = vmatpush1.bf16.msra.mxu0 %v655
        %835 = vmatprep.subr.bf16.mxu0 0
        %836 = vmatpush1.bf16.msra.mxu0 %v656
        %837 = vmatprep.subr.bf16.mxu0 0
        %838 = vmatpush1.bf16.msra.mxu0 %v657
        %839 = vmatprep.subr.bf16.mxu0 0
        %840 = vmatpush1.bf16.msra.mxu0 %v658
        %841 = vmatprep.subr.bf16.mxu0 0
        %842 = vmatpush1.bf16.msra.mxu0 %v659
        %843 = vmatprep.subr.bf16.mxu0 0
        %844 = vmatpush1.bf16.msra.mxu0 %v660
        %845 = vmatprep.subr.bf16.mxu0 0
        %846 = vmatpush1.bf16.msra.mxu0 %v661
        %847 = vmatprep.subr.bf16.mxu0 0
        %848 = vmatpush1.bf16.msra.mxu0 %v662
        %849 = vmatprep.subr.bf16.mxu0 0
        %850 = vmatpush1.bf16.msra.mxu0 %v663
        %851 = vmatprep.subr.bf16.mxu0 0
        %852 = vmatpush1.bf16.msra.mxu0 %v664
        %853 = vmatprep.subr.bf16.mxu0 0
        %854 = vmatpush1.bf16.msra.mxu0 %v724
        %855 = vmatprep.mubr.bf16.mxu0 %v699
        %856 = vmatmul.mubr.bf16.gmra.mrb[0].mxu0 %v415
        %v857 = vpop.f32.mrb[0].mxu0
        %v858 = vadd.f32 %v761, %v857
        %v859 = vpop.f32.mrb[0].mxu0
        %v860 = vpop.f32.mrb[0].mxu0
        %v861 = vadd.f32 %v764, %v860
        %v862 = vpop.f32.mrb[0].mxu0
        %863 = vmatprep.mubr.bf16.mxu0 %v702
        %864 = vmatmul.mubr.bf16.gmra.mrb[0].mxu0 %v419
        %v865 = vpop.f32.mrb[0].mxu0
        %v866 = vadd.f32 %v769, %v865
        %v867 = vpop.f32.mrb[0].mxu0
        %v868 = vpop.f32.mrb[0].mxu0
        %v869 = vadd.f32 %v772, %v868
        %v870 = vpop.f32.mrb[0].mxu0
        %871 = vmatprep.mubr.bf16.mxu0 %v705
        %872 = vmatmul.mubr.bf16.gmra.mrb[0].mxu0 %v423
        %v873 = vpop.f32.mrb[0].mxu0
        %v874 = vadd.f32 %v777, %v873
        %v875 = vpop.f32.mrb[0].mxu0
        %v876 = vpop.f32.mrb[0].mxu0
        %v877 = vadd.f32 %v780, %v876
        %v878 = vpop.f32.mrb[0].mxu0
        %879 = vmatprep.mubr.bf16.mxu0 %v708
        %880 = vmatmul.mubr.bf16.gmra.mrb[0].mxu0 %v427
        %v881 = vpop.f32.mrb[0].mxu0
        %v882 = vadd.f32 %v785, %v881
        %v883 = vpop.f32.mrb[0].mxu0
        %v884 = vpop.f32.mrb[0].mxu0
        %v885 = vadd.f32 %v788, %v884
        %v886 = vpop.f32.mrb[0].mxu0
        %887 = vmatprep.mubr.bf16.mxu0 %v711
        %888 = vmatmul.mubr.bf16.gmra.mrb[0].mxu0 %v431
        %v889 = vpop.f32.mrb[0].mxu0
        %v890 = vadd.f32 %v793, %v889
        %v891 = vpop.f32.mrb[0].mxu0
        %v892 = vpop.f32.mrb[0].mxu0
        %v893 = vadd.f32 %v796, %v892
        %v894 = vpop.f32.mrb[0].mxu0
        %895 = vmatprep.mubr.bf16.mxu0 %v714
        %896 = vmatmul.mubr.bf16.gmra.mrb[0].mxu0 %v435
        %v897 = vpop.f32.mrb[0].mxu0
        %v898 = vadd.f32 %v801, %v897
        %v899 = vpop.f32.mrb[0].mxu0
        %v900 = vpop.f32.mrb[0].mxu0
        %v901 = vadd.f32 %v804, %v900
        %v902 = vpop.f32.mrb[0].mxu0
        %903 = vmatprep.mubr.bf16.mxu0 %v717
        %904 = vmatmul.mubr.bf16.gmra.mrb[0].mxu0 %v439
        %v905 = vpop.f32.mrb[0].mxu0
        %v906 = vadd.f32 %v809, %v905
        %v907 = vpop.f32.mrb[0].mxu0
        %v908 = vpop.f32.mrb[0].mxu0
        %v909 = vadd.f32 %v812, %v908
        %v910 = vpop.f32.mrb[0].mxu0
        %911 = vmatprep.mubr.bf16.mxu0 %v720
        %912 = vmatmul.mubr.bf16.gmra.mrb[0].mxu0 %v443
        %v913 = vpop.f32.mrb[0].mxu0
        %v914 = vadd.f32 %v817, %v913
        %v915 = vpop.f32.mrb[0].mxu0
        %v916 = vpop.f32.mrb[0].mxu0
        %v917 = vadd.f32 %v820, %v916
        %v918 = vpop.f32.mrb[0].mxu0
        %919 = vdwg.mxu0
        %s920 = scalar_lea.vmem [#allocation2], %s338
        %921 = vst [vmem:[%s920] sm:$0xff] %v858
        %922 = vst [vmem:[%s920 + $0x8] sm:$0xff] %v861
        %923 = vst [vmem:[%s920 + $0x10] sm:$0xff] %v866
        %924 = vst [vmem:[%s920 + $0x18] sm:$0xff] %v869
        %925 = vst [vmem:[%s920 + $0x20] sm:$0xff] %v874
        %926 = vst [vmem:[%s920 + $0x28] sm:$0xff] %v877
        %927 = vst [vmem:[%s920 + $0x30] sm:$0xff] %v882
        %928 = vst [vmem:[%s920 + $0x38] sm:$0xff] %v885
        %929 = vst [vmem:[%s920 + $0x40] sm:$0xff] %v890
        %930 = vst [vmem:[%s920 + $0x48] sm:$0xff] %v893
        %931 = vst [vmem:[%s920 + $0x50] sm:$0xff] %v898
        %932 = vst [vmem:[%s920 + $0x58] sm:$0xff] %v901
        %933 = vst [vmem:[%s920 + $0x60] sm:$0xff] %v906
        %934 = vst [vmem:[%s920 + $0x68] sm:$0xff] %v909
        %935 = vst [vmem:[%s920 + $0x70] sm:$0xff] %v914
        %936 = vst [vmem:[%s920 + $0x78] sm:$0xff] %v917
        %v937 = vld [vmem:[#allocation3] sm:$0x1]
        %v938 = vadd.f32 %v858, %v861
        %v939 = vadd.f32 %v938, %v866
        %v940 = vadd.f32 %v939, %v869
        %v941 = vadd.f32 %v940, %v874
        %v942 = vadd.f32 %v941, %v877
        %v943 = vadd.f32 %v942, %v882
        %v944 = vadd.f32 %v943, %v885
        %v945 = vadd.f32 %v944, %v890
        %v946 = vadd.f32 %v945, %v893
        %v947 = vadd.f32 %v946, %v898
        %v948 = vadd.f32 %v947, %v901
        %v949 = vadd.f32 %v948, %v906
        %v950 = vadd.f32 %v949, %v909
        %v951 = vadd.f32 %v950, %v914
        %v952 = vadd.f32 %v951, %v917
        %v953 = vrot.slane %v952, 4
        %v954 = vadd.f32 %v952, %v953
        %v955 = vrot.slane %v954, 2
        %v956 = vadd.f32 %v954, %v955
        %v957 = vrot.slane %v956, 1
        %v958 = vadd.f32 %v956, %v957
        %v959 = vadd.f32 %v937, %v958
        %960 = vst [vmem:[#allocation3] sm:$0x1] %v959
        %v961 = vld [vmem:[#allocation4] sm:$0x1]
        %v962 = vmul.f32 %v858, %v858
        %v963 = vmul.f32 %v861, %v861
        %v964 = vmul.f32 %v866, %v866
        %v965 = vmul.f32 %v869, %v869
        %v966 = vmul.f32 %v874, %v874
        %v967 = vmul.f32 %v877, %v877
        %v968 = vmul.f32 %v882, %v882
        %v969 = vmul.f32 %v885, %v885
        %v970 = vmul.f32 %v890, %v890
        %v971 = vmul.f32 %v893, %v893
        %v972 = vmul.f32 %v898, %v898
        %v973 = vmul.f32 %v901, %v901
        %v974 = vmul.f32 %v906, %v906
        %v975 = vmul.f32 %v909, %v909
        %v976 = vmul.f32 %v914, %v914
        %v977 = vmul.f32 %v917, %v917
        %v978 = vadd.f32 %v962, %v963
        %v979 = vadd.f32 %v978, %v964
        %v980 = vadd.f32 %v979, %v965
        %v981 = vadd.f32 %v980, %v966
        %v982 = vadd.f32 %v981, %v967
        %v983 = vadd.f32 %v982, %v968
        %v984 = vadd.f32 %v983, %v969
        %v985 = vadd.f32 %v984, %v970
        %v986 = vadd.f32 %v985, %v971
        %v987 = vadd.f32 %v986, %v972
        %v988 = vadd.f32 %v987, %v973
        %v989 = vadd.f32 %v988, %v974
        %v990 = vadd.f32 %v989, %v975
        %v991 = vadd.f32 %v990, %v976
        %v992 = vadd.f32 %v991, %v977
        %v993 = vrot.slane %v992, 4
        %v994 = vadd.f32 %v992, %v993
        %v995 = vrot.slane %v994, 2
        %v996 = vadd.f32 %v994, %v995
        %v997 = vrot.slane %v996, 1
        %v998 = vadd.f32 %v996, %v997
        %v999 = vadd.f32 %v961, %v998
        %1000 = vst [vmem:[#allocation4] sm:$0x1] %v999
        %p1001 = scmp.eq.s32.totalorder %s24, 1
        // Predicated region
        $region53: #{autoencoder_forward.1} parent=47 // pred_check
          %p1002 = pneg %p1001
        $region54: #{autoencoder_forward.1} parent=47 // pred_check_branch
          %1004 = sbr.rel (%p1002) target = $region56
        $region55: #{autoencoder_forward.1} parent=47 // pred_region
          %v1005 = vld [vmem:[#allocation3] sm:$0x1]
          %v1006 = vmul.f32 %v1005, 0.00390625
          %v1007 = vld [vmem:[#allocation4] sm:$0x1]
          %v1008 = vmul.f32 %v1007, 0.00390625
          %v1009 = vmul.f32 %v1006, %v1006
          %v1010 = vsub.f32 %v1008, %v1009
          %v1011 = vmax.f32 %v1010, 0.0
          %v1012 = vadd.f32 %v1011, 1e-05
          %v1013 = vrsqrt.pop %v1012
          %v1014 = vld [vmem:[%s2] sm:$0x1]
          %v1015 = vmul.f32 %v1014, %v1013
          %1016 = vst [vmem:[#allocation5] sm:$0x1] %v1015
          %v1017 = vld [vmem:[%s3] sm:$0x1]
          %v1018 = vmul.f32 %v1006, %v1015
          %v1019 = vsub.f32 %v1017, %v1018
          %1020 = vst [vmem:[#allocation6] sm:$0x1] %v1019
        $region56: #{autoencoder_forward.1} parent=47 // pred_fallthru
          _
      $region48: #{autoencoder_forward.1} parent=43 // pred_fallthru
        _
      %p1021 = scmp.eq.s32.totalorder %s23, 1
      // Predicated region
      $region57: #{autoencoder_forward.1} parent=43 // pred_check
        %p1022 = pneg %p1021
      $region58: #{autoencoder_forward.1} parent=43 // pred_check_branch
        %1024 = sbr.rel (%p1022) target = $region60
      $region59: #{autoencoder_forward.1} parent=43 // pred_region
        %s1025 = scalar_lea.vmem [#allocation2], %s338
        %v1026 = vld [vmem:[%s1025] sm:$0xff]
        %v1027 = vld [vmem:[%s1025 + $0x8] sm:$0xff]
        %v1028 = vld [vmem:[%s1025 + $0x10] sm:$0xff]
        %v1029 = vld [vmem:[%s1025 + $0x18] sm:$0xff]
        %v1030 = vld [vmem:[%s1025 + $0x20] sm:$0xff]
        %v1031 = vld [vmem:[%s1025 + $0x28] sm:$0xff]
        %v1032 = vld [vmem:[%s1025 + $0x30] sm:$0xff]
        %v1033 = vld [vmem:[%s1025 + $0x38] sm:$0xff]
        %v1034 = vld [vmem:[%s1025 + $0x40] sm:$0xff]
        %v1035 = vld [vmem:[%s1025 + $0x48] sm:$0xff]
        %v1036 = vld [vmem:[%s1025 + $0x50] sm:$0xff]
        %v1037 = vld [vmem:[%s1025 + $0x58] sm:$0xff]
        %v1038 = vld [vmem:[%s1025 + $0x60] sm:$0xff]
        %v1039 = vld [vmem:[%s1025 + $0x68] sm:$0xff]
        %v1040 = vld [vmem:[%s1025 + $0x70] sm:$0xff]
        %v1041 = vld [vmem:[%s1025 + $0x78] sm:$0xff]
        %v1042 = vld [vmem:[#allocation5] sm:$0x1]
        %v1044 = vlaneseq
        %v1045 = vshrl.u32 %v1044, 7
        %v1046 = vsub.s32 0, %v1045
        %v1047 = vrot.slane %v1042, %v1046
        %v1049 = vmul.f32 %v1026, %v1047
        %v1050 = vmul.f32 %v1027, %v1047
        %v1051 = vmul.f32 %v1028, %v1047
        %v1052 = vmul.f32 %v1029, %v1047
        %v1053 = vmul.f32 %v1030, %v1047
        %v1054 = vmul.f32 %v1031, %v1047
        %v1055 = vmul.f32 %v1032, %v1047
        %v1056 = vmul.f32 %v1033, %v1047
        %v1057 = vmul.f32 %v1034, %v1047
        %v1058 = vmul.f32 %v1035, %v1047
        %v1059 = vmul.f32 %v1036, %v1047
        %v1060 = vmul.f32 %v1037, %v1047
        %v1061 = vmul.f32 %v1038, %v1047
        %v1062 = vmul.f32 %v1039, %v1047
        %v1063 = vmul.f32 %v1040, %v1047
        %v1064 = vmul.f32 %v1041, %v1047
        %v1065 = vld [vmem:[#allocation6] sm:$0x1]
        %v1067 = vlaneseq
        %v1068 = vshrl.u32 %v1067, 7
        %v1069 = vsub.s32 0, %v1068
        %v1070 = vrot.slane %v1065, %v1069
        %v1072 = vadd.f32 %v1049, %v1070
        %v1073 = vadd.f32 %v1050, %v1070
        %v1074 = vadd.f32 %v1051, %v1070
        %v1075 = vadd.f32 %v1052, %v1070
        %v1076 = vadd.f32 %v1053, %v1070
        %v1077 = vadd.f32 %v1054, %v1070
        %v1078 = vadd.f32 %v1055, %v1070
        %v1079 = vadd.f32 %v1056, %v1070
        %v1080 = vadd.f32 %v1057, %v1070
        %v1081 = vadd.f32 %v1058, %v1070
        %v1082 = vadd.f32 %v1059, %v1070
        %v1083 = vadd.f32 %v1060, %v1070
        %v1084 = vadd.f32 %v1061, %v1070
        %v1085 = vadd.f32 %v1062, %v1070
        %v1086 = vadd.f32 %v1063, %v1070
        %v1087 = vadd.f32 %v1064, %v1070
        %vm1088 = vcmp.ge.f32.partialorder %v1072, 0.0
        %vm1089 = vcmp.ge.f32.partialorder %v1073, 0.0
        %vm1090 = vcmp.ge.f32.partialorder %v1074, 0.0
        %vm1091 = vcmp.ge.f32.partialorder %v1075, 0.0
        %vm1092 = vcmp.ge.f32.partialorder %v1076, 0.0
        %vm1093 = vcmp.ge.f32.partialorder %v1077, 0.0
        %vm1094 = vcmp.ge.f32.partialorder %v1078, 0.0
        %vm1095 = vcmp.ge.f32.partialorder %v1079, 0.0
        %vm1096 = vcmp.ge.f32.partialorder %v1080, 0.0
        %vm1097 = vcmp.ge.f32.partialorder %v1081, 0.0
        %vm1098 = vcmp.ge.f32.partialorder %v1082, 0.0
        %vm1099 = vcmp.ge.f32.partialorder %v1083, 0.0
        %vm1100 = vcmp.ge.f32.partialorder %v1084, 0.0
        %vm1101 = vcmp.ge.f32.partialorder %v1085, 0.0
        %vm1102 = vcmp.ge.f32.partialorder %v1086, 0.0
        %vm1103 = vcmp.ge.f32.partialorder %v1087, 0.0
        %v1104 = vmul.f32 %v1072, 0.01
        %v1105 = vmul.f32 %v1073, 0.01
        %v1106 = vmul.f32 %v1074, 0.01
        %v1107 = vmul.f32 %v1075, 0.01
        %v1108 = vmul.f32 %v1076, 0.01
        %v1109 = vmul.f32 %v1077, 0.01
        %v1110 = vmul.f32 %v1078, 0.01
        %v1111 = vmul.f32 %v1079, 0.01
        %v1112 = vmul.f32 %v1080, 0.01
        %v1113 = vmul.f32 %v1081, 0.01
        %v1114 = vmul.f32 %v1082, 0.01
        %v1115 = vmul.f32 %v1083, 0.01
        %v1116 = vmul.f32 %v1084, 0.01
        %v1117 = vmul.f32 %v1085, 0.01
        %v1118 = vmul.f32 %v1086, 0.01
        %v1119 = vmul.f32 %v1087, 0.01
        %v1120 = vsel %vm1088, %v1072, %v1104
        %v1121 = vsel %vm1089, %v1073, %v1105
        %v1122 = vsel %vm1090, %v1074, %v1106
        %v1123 = vsel %vm1091, %v1075, %v1107
        %v1124 = vsel %vm1092, %v1076, %v1108
        %v1125 = vsel %vm1093, %v1077, %v1109
        %v1126 = vsel %vm1094, %v1078, %v1110
        %v1127 = vsel %vm1095, %v1079, %v1111
        %v1128 = vsel %vm1096, %v1080, %v1112
        %v1129 = vsel %vm1097, %v1081, %v1113
        %v1130 = vsel %vm1098, %v1082, %v1114
        %v1131 = vsel %vm1099, %v1083, %v1115
        %v1132 = vsel %vm1100, %v1084, %v1116
        %v1133 = vsel %vm1101, %v1085, %v1117
        %v1134 = vsel %vm1102, %v1086, %v1118
        %v1135 = vsel %vm1103, %v1087, %v1119
        %1136 = vst [vmem:[%s325] sm:$0xff] %v1120
        %1137 = vst [vmem:[%s325 + $0x8] sm:$0xff] %v1121
        %1138 = vst [vmem:[%s325 + $0x10] sm:$0xff] %v1122
        %1139 = vst [vmem:[%s325 + $0x18] sm:$0xff] %v1123
        %1140 = vst [vmem:[%s325 + $0x20] sm:$0xff] %v1124
        %1141 = vst [vmem:[%s325 + $0x28] sm:$0xff] %v1125
        %1142 = vst [vmem:[%s325 + $0x30] sm:$0xff] %v1126
        %1143 = vst [vmem:[%s325 + $0x38] sm:$0xff] %v1127
        %1144 = vst [vmem:[%s325 + $0x40] sm:$0xff] %v1128
        %1145 = vst [vmem:[%s325 + $0x48] sm:$0xff] %v1129
        %1146 = vst [vmem:[%s325 + $0x50] sm:$0xff] %v1130
        %1147 = vst [vmem:[%s325 + $0x58] sm:$0xff] %v1131
        %1148 = vst [vmem:[%s325 + $0x60] sm:$0xff] %v1132
        %1149 = vst [vmem:[%s325 + $0x68] sm:$0xff] %v1133
        %1150 = vst [vmem:[%s325 + $0x70] sm:$0xff] %v1134
        %1151 = vst [vmem:[%s325 + $0x78] sm:$0xff] %v1135
        %v1152 = vpack.c.bf16 %v1121, %v1120
        %v1153 = vpack.c.bf16 %v1123, %v1122
        %v1154 = vpack.c.bf16 %v1125, %v1124
        %v1155 = vpack.c.bf16 %v1127, %v1126
        %v1156 = vpack.c.bf16 %v1129, %v1128
        %v1157 = vpack.c.bf16 %v1131, %v1130
        %v1158 = vpack.c.bf16 %v1133, %v1132
        %v1159 = vpack.c.bf16 %v1135, %v1134
        %v1160 = vld [vmem:[%s4] sm:$0xff]
        %v1161 = vld [vmem:[%s4 + $0x8] sm:$0xff]
        %v1162 = vld [vmem:[%s4 + $0x10] sm:$0xff]
        %v1163 = vld [vmem:[%s4 + $0x18] sm:$0xff]
        %v1164 = vld [vmem:[%s4 + $0x20] sm:$0xff]
        %v1165 = vld [vmem:[%s4 + $0x28] sm:$0xff]
        %v1166 = vld [vmem:[%s4 + $0x30] sm:$0xff]
        %v1167 = vld [vmem:[%s4 + $0x38] sm:$0xff]
        %v1168 = vld [vmem:[%s4 + $0x40] sm:$0xff]
        %v1169 = vld [vmem:[%s4 + $0x48] sm:$0xff]
        %v1170 = vld [vmem:[%s4 + $0x50] sm:$0xff]
        %v1171 = vld [vmem:[%s4 + $0x58] sm:$0xff]
        %v1172 = vld [vmem:[%s4 + $0x60] sm:$0xff]
        %v1173 = vld [vmem:[%s4 + $0x68] sm:$0xff]
        %v1174 = vld [vmem:[%s4 + $0x70] sm:$0xff]
        %v1175 = vld [vmem:[%s4 + $0x78] sm:$0xff]
        %v1176 = vld [vmem:[%s4 + $0x80] sm:$0xff]
        %v1177 = vld [vmem:[%s4 + $0x88] sm:$0xff]
        %v1178 = vld [vmem:[%s4 + $0x90] sm:$0xff]
        %v1179 = vld [vmem:[%s4 + $0x98] sm:$0xff]
        %v1180 = vld [vmem:[%s4 + $0xa0] sm:$0xff]
        %v1181 = vld [vmem:[%s4 + $0xa8] sm:$0xff]
        %v1182 = vld [vmem:[%s4 + $0xb0] sm:$0xff]
        %v1183 = vld [vmem:[%s4 + $0xb8] sm:$0xff]
        %v1184 = vld [vmem:[%s4 + $0xc0] sm:$0xff]
        %v1185 = vld [vmem:[%s4 + $0xc8] sm:$0xff]
        %v1186 = vld [vmem:[%s4 + $0xd0] sm:$0xff]
        %v1187 = vld [vmem:[%s4 + $0xd8] sm:$0xff]
        %v1188 = vld [vmem:[%s4 + $0xe0] sm:$0xff]
        %v1189 = vld [vmem:[%s4 + $0xe8] sm:$0xff]
        %v1190 = vld [vmem:[%s4 + $0xf0] sm:$0xff]
        %v1191 = vld [vmem:[%s4 + $0xf8] sm:$0xff]
        %v1192 = vld [vmem:[%s5] sm:$0xf]
        %v1194 = vlaneseq
        %v1195 = vshrl.u32 %v1194, 7
        %v1196 = vsub.s32 0, %v1195
        %v1197 = vrot.slane %v1192, %v1196
        %v1198 = vlaneseq
        %v1199 = vshrl.u32 %v1198, 7
        %v1200 = vsub.s32 1, %v1199
        %v1201 = vrot.slane %v1192, %v1200
        %v1202 = vlaneseq
        %v1203 = vshrl.u32 %v1202, 7
        %v1204 = vsub.s32 2, %v1203
        %v1205 = vrot.slane %v1192, %v1204
        %v1206 = vlaneseq
        %v1207 = vshrl.u32 %v1206, 7
        %v1208 = vsub.s32 3, %v1207
        %v1209 = vrot.slane %v1192, %v1208
        %v1246 = vunpack.c.l.b16 %v1160
        %v1247 = vunpack.c.h.b16 %v1160
        %v1248 = vunpack.c.l.b16 %v1161
        %v1249 = vunpack.c.h.b16 %v1161
        %v1250 = vunpack.c.l.b16 %v1162
        %v1251 = vunpack.c.h.b16 %v1162
        %v1252 = vunpack.c.l.b16 %v1163
        %v1253 = vunpack.c.h.b16 %v1163
        %v1254 = vunpack.c.l.b16 %v1164
        %v1255 = vunpack.c.h.b16 %v1164
        %v1256 = vunpack.c.l.b16 %v1165
        %v1257 = vunpack.c.h.b16 %v1165
        %v1258 = vunpack.c.l.b16 %v1166
        %v1259 = vunpack.c.h.b16 %v1166
        %v1260 = vunpack.c.l.b16 %v1167
        %v1261 = vunpack.c.h.b16 %v1167
        %v1262 = vunpack.c.l.b16 %v1168
        %v1263 = vunpack.c.h.b16 %v1168
        %v1264 = vunpack.c.l.b16 %v1169
        %v1265 = vunpack.c.h.b16 %v1169
        %v1266 = vunpack.c.l.b16 %v1170
        %v1267 = vunpack.c.h.b16 %v1170
        %v1268 = vunpack.c.l.b16 %v1171
        %v1269 = vunpack.c.h.b16 %v1171
        %v1270 = vunpack.c.l.b16 %v1172
        %v1271 = vunpack.c.h.b16 %v1172
        %v1272 = vunpack.c.l.b16 %v1173
        %v1273 = vunpack.c.h.b16 %v1173
        %v1274 = vunpack.c.l.b16 %v1174
        %v1275 = vunpack.c.h.b16 %v1174
        %v1276 = vunpack.c.l.b16 %v1175
        %v1277 = vunpack.c.h.b16 %v1175
        %v1278 = vunpack.c.l.b16 %v1176
        %v1279 = vunpack.c.h.b16 %v1176
        %v1280 = vunpack.c.l.b16 %v1177
        %v1281 = vunpack.c.h.b16 %v1177
        %v1282 = vunpack.c.l.b16 %v1178
        %v1283 = vunpack.c.h.b16 %v1178
        %v1284 = vunpack.c.l.b16 %v1179
        %v1285 = vunpack.c.h.b16 %v1179
        %v1286 = vunpack.c.l.b16 %v1180
        %v1287 = vunpack.c.h.b16 %v1180
        %v1288 = vunpack.c.l.b16 %v1181
        %v1289 = vunpack.c.h.b16 %v1181
        %v1290 = vunpack.c.l.b16 %v1182
        %v1291 = vunpack.c.h.b16 %v1182
        %v1292 = vunpack.c.l.b16 %v1183
        %v1293 = vunpack.c.h.b16 %v1183
        %v1294 = vunpack.c.l.b16 %v1184
        %v1295 = vunpack.c.h.b16 %v1184
        %v1296 = vunpack.c.l.b16 %v1185
        %v1297 = vunpack.c.h.b16 %v1185
        %v1298 = vunpack.c.l.b16 %v1186
        %v1299 = vunpack.c.h.b16 %v1186
        %v1300 = vunpack.c.l.b16 %v1187
        %v1301 = vunpack.c.h.b16 %v1187
        %v1302 = vunpack.c.l.b16 %v1188
        %v1303 = vunpack.c.h.b16 %v1188
        %v1304 = vunpack.c.l.b16 %v1189
        %v1305 = vunpack.c.h.b16 %v1189
        %v1306 = vunpack.c.l.b16 %v1190
        %v1307 = vunpack.c.h.b16 %v1190
        %v1308 = vunpack.c.l.b16 %v1191
        %v1309 = vunpack.c.h.b16 %v1191
        %v1310 = vpack.c.b16 %v1250, %v1246
        %v1311 = vpack.c.b16 %v1251, %v1247
        %v1312 = vpack.c.b16 %v1252, %v1248
        %v1313 = vpack.c.b16 %v1253, %v1249
        %v1314 = vpack.c.b16 %v1258, %v1254
        %v1315 = vpack.c.b16 %v1259, %v1255
        %v1316 = vpack.c.b16 %v1260, %v1256
        %v1317 = vpack.c.b16 %v1261, %v1257
        %v1318 = vpack.c.b16 %v1266, %v1262
        %v1319 = vpack.c.b16 %v1267, %v1263
        %v1320 = vpack.c.b16 %v1268, %v1264
        %v1321 = vpack.c.b16 %v1269, %v1265
        %v1322 = vpack.c.b16 %v1274, %v1270
        %v1323 = vpack.c.b16 %v1275, %v1271
        %v1324 = vpack.c.b16 %v1276, %v1272
        %v1325 = vpack.c.b16 %v1277, %v1273
        %v1326 = vpack.c.b16 %v1282, %v1278
        %v1327 = vpack.c.b16 %v1283, %v1279
        %v1328 = vpack.c.b16 %v1284, %v1280
        %v1329 = vpack.c.b16 %v1285, %v1281
        %v1330 = vpack.c.b16 %v1290, %v1286
        %v1331 = vpack.c.b16 %v1291, %v1287
        %v1332 = vpack.c.b16 %v1292, %v1288
        %v1333 = vpack.c.b16 %v1293, %v1289
        %v1334 = vpack.c.b16 %v1298, %v1294
        %v1335 = vpack.c.b16 %v1299, %v1295
        %v1336 = vpack.c.b16 %v1300, %v1296
        %v1337 = vpack.c.b16 %v1301, %v1297
        %v1338 = vpack.c.b16 %v1306, %v1302
        %v1339 = vpack.c.b16 %v1307, %v1303
        %v1340 = vpack.c.b16 %v1308, %v1304
        %v1341 = vpack.c.b16 %v1309, %v1305
        %1374 = vmatprep.subr.bf16.mxu0 %v1311
        %1375 = vmatpush1.bf16.msra.mxu0 %v1310
        %1376 = vmatprep.subr.bf16.mxu0 %v1315
        %1377 = vmatpush1.bf16.msra.mxu0 %v1314
        %1378 = vmatprep.subr.bf16.mxu0 %v1319
        %1379 = vmatpush1.bf16.msra.mxu0 %v1318
        %1380 = vmatprep.subr.bf16.mxu0 %v1323
        %1381 = vmatpush1.bf16.msra.mxu0 %v1322
        %1382 = vmatprep.subr.bf16.mxu0 %v1327
        %1383 = vmatpush1.bf16.msra.mxu0 %v1326
        %1384 = vmatprep.subr.bf16.mxu0 %v1331
        %1385 = vmatpush1.bf16.msra.mxu0 %v1330
        %1386 = vmatprep.subr.bf16.mxu0 %v1335
        %1387 = vmatpush1.bf16.msra.mxu0 %v1334
        %1388 = vmatprep.subr.bf16.mxu0 %v1339
        %1389 = vmatpush1.bf16.msra.mxu0 %v1338
        %1390 = vmatprep.subr.bf16.mxu0 0
        %1391 = vmatpush1.bf16.msra.mxu0 0
        %1392 = vmatprep.subr.bf16.mxu0 0
        %1393 = vmatpush1.bf16.msra.mxu0 0
        %1394 = vmatprep.subr.bf16.mxu0 0
        %1395 = vmatpush1.bf16.msra.mxu0 0
        %1396 = vmatprep.subr.bf16.mxu0 0
        %1397 = vmatpush1.bf16.msra.mxu0 0
        %1398 = vmatprep.subr.bf16.mxu0 0
        %1399 = vmatpush1.bf16.msra.mxu0 0
        %1400 = vmatprep.subr.bf16.mxu0 0
        %1401 = vmatpush1.bf16.msra.mxu0 0
        %1402 = vmatprep.subr.bf16.mxu0 0
        %1403 = vmatpush1.bf16.msra.mxu0 0
        %1404 = vmatprep.subr.bf16.mxu0 0
        %1405 = vmatpush1.bf16.msra.mxu0 0
        %1406 = vmatprep.mubr.bf16.mxu0 0
        %1407 = vmatmul.mubr.bf16.gmra.mrb[0].mxu0 %v1152
        %v1408 = vpop.f32.mrb[0].mxu0
        %v1409 = vadd.f32 %v1197, %v1408
        %v1410 = vpop.f32.mrb[0].mxu0
        %v1411 = vadd.f32 %v1201, %v1410
        %v1412 = vpop.f32.mrb[0].mxu0
        %v1413 = vadd.f32 %v1197, %v1412
        %v1414 = vpop.f32.mrb[0].mxu0
        %v1415 = vadd.f32 %v1201, %v1414
        %1416 = vmatprep.mubr.bf16.mxu0 0
        %1417 = vmatmul.mubr.bf16.gmra.mrb[0].mxu0 %v1153
        %v1418 = vpop.f32.mrb[0].mxu0
        %v1419 = vadd.f32 %v1197, %v1418
        %v1420 = vpop.f32.mrb[0].mxu0
        %v1421 = vadd.f32 %v1201, %v1420
        %v1422 = vpop.f32.mrb[0].mxu0
        %v1423 = vadd.f32 %v1197, %v1422
        %v1424 = vpop.f32.mrb[0].mxu0
        %v1425 = vadd.f32 %v1201, %v1424
        %1426 = vmatprep.mubr.bf16.mxu0 0
        %1427 = vmatmul.mubr.bf16.gmra.mrb[0].mxu0 %v1154
        %v1428 = vpop.f32.mrb[0].mxu0
        %v1429 = vadd.f32 %v1197, %v1428
        %v1430 = vpop.f32.mrb[0].mxu0
        %v1431 = vadd.f32 %v1201, %v1430
        %v1432 = vpop.f32.mrb[0].mxu0
        %v1433 = vadd.f32 %v1197, %v1432
        %v1434 = vpop.f32.mrb[0].mxu0
        %v1435 = vadd.f32 %v1201, %v1434
        %1436 = vmatprep.mubr.bf16.mxu0 0
        %1437 = vmatmul.mubr.bf16.gmra.mrb[0].mxu0 %v1155
        %v1438 = vpop.f32.mrb[0].mxu0
        %v1439 = vadd.f32 %v1197, %v1438
        %v1440 = vpop.f32.mrb[0].mxu0
        %v1441 = vadd.f32 %v1201, %v1440
        %v1442 = vpop.f32.mrb[0].mxu0
        %v1443 = vadd.f32 %v1197, %v1442
        %v1444 = vpop.f32.mrb[0].mxu0
        %v1445 = vadd.f32 %v1201, %v1444
        %1446 = vmatprep.mubr.bf16.mxu0 0
        %1447 = vmatmul.mubr.bf16.gmra.mrb[0].mxu0 %v1156
        %v1448 = vpop.f32.mrb[0].mxu0
        %v1449 = vadd.f32 %v1197, %v1448
        %v1450 = vpop.f32.mrb[0].mxu0
        %v1451 = vadd.f32 %v1201, %v1450
        %v1452 = vpop.f32.mrb[0].mxu0
        %v1453 = vadd.f32 %v1197, %v1452
        %v1454 = vpop.f32.mrb[0].mxu0
        %v1455 = vadd.f32 %v1201, %v1454
        %1456 = vmatprep.mubr.bf16.mxu0 0
        %1457 = vmatmul.mubr.bf16.gmra.mrb[0].mxu0 %v1157
        %v1458 = vpop.f32.mrb[0].mxu0
        %v1459 = vadd.f32 %v1197, %v1458
        %v1460 = vpop.f32.mrb[0].mxu0
        %v1461 = vadd.f32 %v1201, %v1460
        %v1462 = vpop.f32.mrb[0].mxu0
        %v1463 = vadd.f32 %v1197, %v1462
        %v1464 = vpop.f32.mrb[0].mxu0
        %v1465 = vadd.f32 %v1201, %v1464
        %1466 = vmatprep.mubr.bf16.mxu0 0
        %1467 = vmatmul.mubr.bf16.gmra.mrb[0].mxu0 %v1158
        %v1468 = vpop.f32.mrb[0].mxu0
        %v1469 = vadd.f32 %v1197, %v1468
        %v1470 = vpop.f32.mrb[0].mxu0
        %v1471 = vadd.f32 %v1201, %v1470
        %v1472 = vpop.f32.mrb[0].mxu0
        %v1473 = vadd.f32 %v1197, %v1472
        %v1474 = vpop.f32.mrb[0].mxu0
        %v1475 = vadd.f32 %v1201, %v1474
        %1476 = vmatprep.mubr.bf16.mxu0 0
        %1477 = vmatmul.mubr.bf16.gmra.mrb[0].mxu0 %v1159
        %v1478 = vpop.f32.mrb[0].mxu0
        %v1479 = vadd.f32 %v1197, %v1478
        %v1480 = vpop.f32.mrb[0].mxu0
        %v1481 = vadd.f32 %v1201, %v1480
        %v1482 = vpop.f32.mrb[0].mxu0
        %v1483 = vadd.f32 %v1197, %v1482
        %v1484 = vpop.f32.mrb[0].mxu0
        %v1485 = vadd.f32 %v1201, %v1484
        %1486 = vdwg.mxu0
        %1487 = vmatprep.subr.bf16.mxu0 %v1313
        %1488 = vmatpush1.bf16.msra.mxu0 %v1312
        %1489 = vmatprep.subr.bf16.mxu0 %v1317
        %1490 = vmatpush1.bf16.msra.mxu0 %v1316
        %1491 = vmatprep.subr.bf16.mxu0 %v1321
        %1492 = vmatpush1.bf16.msra.mxu0 %v1320
        %1493 = vmatprep.subr.bf16.mxu0 %v1325
        %1494 = vmatpush1.bf16.msra.mxu0 %v1324
        %1495 = vmatprep.subr.bf16.mxu0 %v1329
        %1496 = vmatpush1.bf16.msra.mxu0 %v1328
        %1497 = vmatprep.subr.bf16.mxu0 %v1333
        %1498 = vmatpush1.bf16.msra.mxu0 %v1332
        %1499 = vmatprep.subr.bf16.mxu0 %v1337
        %1500 = vmatpush1.bf16.msra.mxu0 %v1336
        %1501 = vmatprep.subr.bf16.mxu0 %v1341
        %1502 = vmatpush1.bf16.msra.mxu0 %v1340
        %1503 = vmatprep.subr.bf16.mxu0 0
        %1504 = vmatpush1.bf16.msra.mxu0 0
        %1505 = vmatprep.subr.bf16.mxu0 0
        %1506 = vmatpush1.bf16.msra.mxu0 0
        %1507 = vmatprep.subr.bf16.mxu0 0
        %1508 = vmatpush1.bf16.msra.mxu0 0
        %1509 = vmatprep.subr.bf16.mxu0 0
        %1510 = vmatpush1.bf16.msra.mxu0 0
        %1511 = vmatprep.subr.bf16.mxu0 0
        %1512 = vmatpush1.bf16.msra.mxu0 0
        %1513 = vmatprep.subr.bf16.mxu0 0
        %1514 = vmatpush1.bf16.msra.mxu0 0
        %1515 = vmatprep.subr.bf16.mxu0 0
        %1516 = vmatpush1.bf16.msra.mxu0 0
        %1517 = vmatprep.subr.bf16.mxu0 0
        %1518 = vmatpush1.bf16.msra.mxu0 0
        %1519 = vmatprep.mubr.bf16.mxu0 0
        %1520 = vmatmul.mubr.bf16.gmra.mrb[0].mxu0 %v1152
        %v1521 = vpop.f32.mrb[0].mxu0
        %v1522 = vadd.f32 %v1205, %v1521
        %v1523 = vpop.f32.mrb[0].mxu0
        %v1524 = vadd.f32 %v1209, %v1523
        %v1525 = vpop.f32.mrb[0].mxu0
        %v1526 = vadd.f32 %v1205, %v1525
        %v1527 = vpop.f32.mrb[0].mxu0
        %v1528 = vadd.f32 %v1209, %v1527
        %1529 = vmatprep.mubr.bf16.mxu0 0
        %1530 = vmatmul.mubr.bf16.gmra.mrb[0].mxu0 %v1153
        %v1531 = vpop.f32.mrb[0].mxu0
        %v1532 = vadd.f32 %v1205, %v1531
        %v1533 = vpop.f32.mrb[0].mxu0
        %v1534 = vadd.f32 %v1209, %v1533
        %v1535 = vpop.f32.mrb[0].mxu0
        %v1536 = vadd.f32 %v1205, %v1535
        %v1537 = vpop.f32.mrb[0].mxu0
        %v1538 = vadd.f32 %v1209, %v1537
        %1539 = vmatprep.mubr.bf16.mxu0 0
        %1540 = vmatmul.mubr.bf16.gmra.mrb[0].mxu0 %v1154
        %v1541 = vpop.f32.mrb[0].mxu0
        %v1542 = vadd.f32 %v1205, %v1541
        %v1543 = vpop.f32.mrb[0].mxu0
        %v1544 = vadd.f32 %v1209, %v1543
        %v1545 = vpop.f32.mrb[0].mxu0
        %v1546 = vadd.f32 %v1205, %v1545
        %v1547 = vpop.f32.mrb[0].mxu0
        %v1548 = vadd.f32 %v1209, %v1547
        %1549 = vmatprep.mubr.bf16.mxu0 0
        %1550 = vmatmul.mubr.bf16.gmra.mrb[0].mxu0 %v1155
        %v1551 = vpop.f32.mrb[0].mxu0
        %v1552 = vadd.f32 %v1205, %v1551
        %v1553 = vpop.f32.mrb[0].mxu0
        %v1554 = vadd.f32 %v1209, %v1553
        %v1555 = vpop.f32.mrb[0].mxu0
        %v1556 = vadd.f32 %v1205, %v1555
        %v1557 = vpop.f32.mrb[0].mxu0
        %v1558 = vadd.f32 %v1209, %v1557
        %1559 = vmatprep.mubr.bf16.mxu0 0
        %1560 = vmatmul.mubr.bf16.gmra.mrb[0].mxu0 %v1156
        %v1561 = vpop.f32.mrb[0].mxu0
        %v1562 = vadd.f32 %v1205, %v1561
        %v1563 = vpop.f32.mrb[0].mxu0
        %v1564 = vadd.f32 %v1209, %v1563
        %v1565 = vpop.f32.mrb[0].mxu0
        %v1566 = vadd.f32 %v1205, %v1565
        %v1567 = vpop.f32.mrb[0].mxu0
        %v1568 = vadd.f32 %v1209, %v1567
        %1569 = vmatprep.mubr.bf16.mxu0 0
        %1570 = vmatmul.mubr.bf16.gmra.mrb[0].mxu0 %v1157
        %v1571 = vpop.f32.mrb[0].mxu0
        %v1572 = vadd.f32 %v1205, %v1571
        %v1573 = vpop.f32.mrb[0].mxu0
        %v1574 = vadd.f32 %v1209, %v1573
        %v1575 = vpop.f32.mrb[0].mxu0
        %v1576 = vadd.f32 %v1205, %v1575
        %v1577 = vpop.f32.mrb[0].mxu0
        %v1578 = vadd.f32 %v1209, %v1577
        %1579 = vmatprep.mubr.bf16.mxu0 0
        %1580 = vmatmul.mubr.bf16.gmra.mrb[0].mxu0 %v1158
        %v1581 = vpop.f32.mrb[0].mxu0
        %v1582 = vadd.f32 %v1205, %v1581
        %v1583 = vpop.f32.mrb[0].mxu0
        %v1584 = vadd.f32 %v1209, %v1583
        %v1585 = vpop.f32.mrb[0].mxu0
        %v1586 = vadd.f32 %v1205, %v1585
        %v1587 = vpop.f32.mrb[0].mxu0
        %v1588 = vadd.f32 %v1209, %v1587
        %1589 = vmatprep.mubr.bf16.mxu0 0
        %1590 = vmatmul.mubr.bf16.gmra.mrb[0].mxu0 %v1159
        %v1591 = vpop.f32.mrb[0].mxu0
        %v1592 = vadd.f32 %v1205, %v1591
        %v1593 = vpop.f32.mrb[0].mxu0
        %v1594 = vadd.f32 %v1209, %v1593
        %v1595 = vpop.f32.mrb[0].mxu0
        %v1596 = vadd.f32 %v1205, %v1595
        %v1597 = vpop.f32.mrb[0].mxu0
        %v1598 = vadd.f32 %v1209, %v1597
        %1599 = vdwg.mxu0
        %v1600 = vxor.u32 %v1409, 2147483648
        %v1601 = vxor.u32 %v1411, 2147483648
        %v1602 = vxor.u32 %v1522, 2147483648
        %v1603 = vxor.u32 %v1524, 2147483648
        %v1604 = vxor.u32 %v1413, 2147483648
        %v1605 = vxor.u32 %v1415, 2147483648
        %v1606 = vxor.u32 %v1526, 2147483648
        %v1607 = vxor.u32 %v1528, 2147483648
        %v1608 = vxor.u32 %v1419, 2147483648
        %v1609 = vxor.u32 %v1421, 2147483648
        %v1610 = vxor.u32 %v1532, 2147483648
        %v1611 = vxor.u32 %v1534, 2147483648
        %v1612 = vxor.u32 %v1423, 2147483648
        %v1613 = vxor.u32 %v1425, 2147483648
        %v1614 = vxor.u32 %v1536, 2147483648
        %v1615 = vxor.u32 %v1538, 2147483648
        %v1616 = vxor.u32 %v1429, 2147483648
        %v1617 = vxor.u32 %v1431, 2147483648
        %v1618 = vxor.u32 %v1542, 2147483648
        %v1619 = vxor.u32 %v1544, 2147483648
        %v1620 = vxor.u32 %v1433, 2147483648
        %v1621 = vxor.u32 %v1435, 2147483648
        %v1622 = vxor.u32 %v1546, 2147483648
        %v1623 = vxor.u32 %v1548, 2147483648
        %v1624 = vxor.u32 %v1439, 2147483648
        %v1625 = vxor.u32 %v1441, 2147483648
        %v1626 = vxor.u32 %v1552, 2147483648
        %v1627 = vxor.u32 %v1554, 2147483648
        %v1628 = vxor.u32 %v1443, 2147483648
        %v1629 = vxor.u32 %v1445, 2147483648
        %v1630 = vxor.u32 %v1556, 2147483648
        %v1631 = vxor.u32 %v1558, 2147483648
        %v1632 = vxor.u32 %v1449, 2147483648
        %v1633 = vxor.u32 %v1451, 2147483648
        %v1634 = vxor.u32 %v1562, 2147483648
        %v1635 = vxor.u32 %v1564, 2147483648
        %v1636 = vxor.u32 %v1453, 2147483648
        %v1637 = vxor.u32 %v1455, 2147483648
        %v1638 = vxor.u32 %v1566, 2147483648
        %v1639 = vxor.u32 %v1568, 2147483648
        %v1640 = vxor.u32 %v1459, 2147483648
        %v1641 = vxor.u32 %v1461, 2147483648
        %v1642 = vxor.u32 %v1572, 2147483648
        %v1643 = vxor.u32 %v1574, 2147483648
        %v1644 = vxor.u32 %v1463, 2147483648
        %v1645 = vxor.u32 %v1465, 2147483648
        %v1646 = vxor.u32 %v1576, 2147483648
        %v1647 = vxor.u32 %v1578, 2147483648
        %v1648 = vxor.u32 %v1469, 2147483648
        %v1649 = vxor.u32 %v1471, 2147483648
        %v1650 = vxor.u32 %v1582, 2147483648
        %v1651 = vxor.u32 %v1584, 2147483648
        %v1652 = vxor.u32 %v1473, 2147483648
        %v1653 = vxor.u32 %v1475, 2147483648
        %v1654 = vxor.u32 %v1586, 2147483648
        %v1655 = vxor.u32 %v1588, 2147483648
        %v1656 = vxor.u32 %v1479, 2147483648
        %v1657 = vxor.u32 %v1481, 2147483648
        %v1658 = vxor.u32 %v1592, 2147483648
        %v1659 = vxor.u32 %v1594, 2147483648
        %v1660 = vxor.u32 %v1483, 2147483648
        %v1661 = vxor.u32 %v1485, 2147483648
        %v1662 = vxor.u32 %v1596, 2147483648
        %v1663 = vxor.u32 %v1598, 2147483648
        %v1664 = vmul.f32 %v1600, 1.442695
        %v1665 = vpow.pop %v1664
        %v1666 = vmul.f32 %v1601, 1.442695
        %v1667 = vpow.pop %v1666
        %v1668 = vmul.f32 %v1602, 1.442695
        %v1669 = vpow.pop %v1668
        %v1670 = vmul.f32 %v1603, 1.442695
        %v1671 = vpow.pop %v1670
        %v1672 = vmul.f32 %v1604, 1.442695
        %v1673 = vpow.pop %v1672
        %v1674 = vmul.f32 %v1605, 1.442695
        %v1675 = vpow.pop %v1674
        %v1676 = vmul.f32 %v1606, 1.442695
        %v1677 = vpow.pop %v1676
        %v1678 = vmul.f32 %v1607, 1.442695
        %v1679 = vpow.pop %v1678
        %v1680 = vmul.f32 %v1608, 1.442695
        %v1681 = vpow.pop %v1680
        %v1682 = vmul.f32 %v1609, 1.442695
        %v1683 = vpow.pop %v1682
        %v1684 = vmul.f32 %v1610, 1.442695
        %v1685 = vpow.pop %v1684
        %v1686 = vmul.f32 %v1611, 1.442695
        %v1687 = vpow.pop %v1686
        %v1688 = vmul.f32 %v1612, 1.442695
        %v1689 = vpow.pop %v1688
        %v1690 = vmul.f32 %v1613, 1.442695
        %v1691 = vpow.pop %v1690
        %v1692 = vmul.f32 %v1614, 1.442695
        %v1693 = vpow.pop %v1692
        %v1694 = vmul.f32 %v1615, 1.442695
        %v1695 = vpow.pop %v1694
        %v1696 = vmul.f32 %v1616, 1.442695
        %v1697 = vpow.pop %v1696
        %v1698 = vmul.f32 %v1617, 1.442695
        %v1699 = vpow.pop %v1698
        %v1700 = vmul.f32 %v1618, 1.442695
        %v1701 = vpow.pop %v1700
        %v1702 = vmul.f32 %v1619, 1.442695
        %v1703 = vpow.pop %v1702
        %v1704 = vmul.f32 %v1620, 1.442695
        %v1705 = vpow.pop %v1704
        %v1706 = vmul.f32 %v1621, 1.442695
        %v1707 = vpow.pop %v1706
        %v1708 = vmul.f32 %v1622, 1.442695
        %v1709 = vpow.pop %v1708
        %v1710 = vmul.f32 %v1623, 1.442695
        %v1711 = vpow.pop %v1710
        %v1712 = vmul.f32 %v1624, 1.442695
        %v1713 = vpow.pop %v1712
        %v1714 = vmul.f32 %v1625, 1.442695
        %v1715 = vpow.pop %v1714
        %v1716 = vmul.f32 %v1626, 1.442695
        %v1717 = vpow.pop %v1716
        %v1718 = vmul.f32 %v1627, 1.442695
        %v1719 = vpow.pop %v1718
        %v1720 = vmul.f32 %v1628, 1.442695
        %v1721 = vpow.pop %v1720
        %v1722 = vmul.f32 %v1629, 1.442695
        %v1723 = vpow.pop %v1722
        %v1724 = vmul.f32 %v1630, 1.442695
        %v1725 = vpow.pop %v1724
        %v1726 = vmul.f32 %v1631, 1.442695
        %v1727 = vpow.pop %v1726
        %v1728 = vmul.f32 %v1632, 1.442695
        %v1729 = vpow.pop %v1728
        %v1730 = vmul.f32 %v1633, 1.442695
        %v1731 = vpow.pop %v1730
        %v1732 = vmul.f32 %v1634, 1.442695
        %v1733 = vpow.pop %v1732
        %v1734 = vmul.f32 %v1635, 1.442695
        %v1735 = vpow.pop %v1734
        %v1736 = vmul.f32 %v1636, 1.442695
        %v1737 = vpow.pop %v1736
        %v1738 = vmul.f32 %v1637, 1.442695
        %v1739 = vpow.pop %v1738
        %v1740 = vmul.f32 %v1638, 1.442695
        %v1741 = vpow.pop %v1740
        %v1742 = vmul.f32 %v1639, 1.442695
        %v1743 = vpow.pop %v1742
        %v1744 = vmul.f32 %v1640, 1.442695
        %v1745 = vpow.pop %v1744
        %v1746 = vmul.f32 %v1641, 1.442695
        %v1747 = vpow.pop %v1746
        %v1748 = vmul.f32 %v1642, 1.442695
        %v1749 = vpow.pop %v1748
        %v1750 = vmul.f32 %v1643, 1.442695
        %v1751 = vpow.pop %v1750
        %v1752 = vmul.f32 %v1644, 1.442695
        %v1753 = vpow.pop %v1752
        %v1754 = vmul.f32 %v1645, 1.442695
        %v1755 = vpow.pop %v1754
        %v1756 = vmul.f32 %v1646, 1.442695
        %v1757 = vpow.pop %v1756
        %v1758 = vmul.f32 %v1647, 1.442695
        %v1759 = vpow.pop %v1758
        %v1760 = vmul.f32 %v1648, 1.442695
        %v1761 = vpow.pop %v1760
        %v1762 = vmul.f32 %v1649, 1.442695
        %v1763 = vpow.pop %v1762
        %v1764 = vmul.f32 %v1650, 1.442695
        %v1765 = vpow.pop %v1764
        %v1766 = vmul.f32 %v1651, 1.442695
        %v1767 = vpow.pop %v1766
        %v1768 = vmul.f32 %v1652, 1.442695
        %v1769 = vpow.pop %v1768
        %v1770 = vmul.f32 %v1653, 1.442695
        %v1771 = vpow.pop %v1770
        %v1772 = vmul.f32 %v1654, 1.442695
        %v1773 = vpow.pop %v1772
        %v1774 = vmul.f32 %v1655, 1.442695
        %v1775 = vpow.pop %v1774
        %v1776 = vmul.f32 %v1656, 1.442695
        %v1777 = vpow.pop %v1776
        %v1778 = vmul.f32 %v1657, 1.442695
        %v1779 = vpow.pop %v1778
        %v1780 = vmul.f32 %v1658, 1.442695
        %v1781 = vpow.pop %v1780
        %v1782 = vmul.f32 %v1659, 1.442695
        %v1783 = vpow.pop %v1782
        %v1784 = vmul.f32 %v1660, 1.442695
        %v1785 = vpow.pop %v1784
        %v1786 = vmul.f32 %v1661, 1.442695
        %v1787 = vpow.pop %v1786
        %v1788 = vmul.f32 %v1662, 1.442695
        %v1789 = vpow.pop %v1788
        %v1790 = vmul.f32 %v1663, 1.442695
        %v1791 = vpow.pop %v1790
        %v1792 = vadd.f32 %v1665, 1.0
        %v1793 = vadd.f32 %v1667, 1.0
        %v1794 = vadd.f32 %v1669, 1.0
        %v1795 = vadd.f32 %v1671, 1.0
        %v1796 = vadd.f32 %v1673, 1.0
        %v1797 = vadd.f32 %v1675, 1.0
        %v1798 = vadd.f32 %v1677, 1.0
        %v1799 = vadd.f32 %v1679, 1.0
        %v1800 = vadd.f32 %v1681, 1.0
        %v1801 = vadd.f32 %v1683, 1.0
        %v1802 = vadd.f32 %v1685, 1.0
        %v1803 = vadd.f32 %v1687, 1.0
        %v1804 = vadd.f32 %v1689, 1.0
        %v1805 = vadd.f32 %v1691, 1.0
        %v1806 = vadd.f32 %v1693, 1.0
        %v1807 = vadd.f32 %v1695, 1.0
        %v1808 = vadd.f32 %v1697, 1.0
        %v1809 = vadd.f32 %v1699, 1.0
        %v1810 = vadd.f32 %v1701, 1.0
        %v1811 = vadd.f32 %v1703, 1.0
        %v1812 = vadd.f32 %v1705, 1.0
        %v1813 = vadd.f32 %v1707, 1.0
        %v1814 = vadd.f32 %v1709, 1.0
        %v1815 = vadd.f32 %v1711, 1.0
        %v1816 = vadd.f32 %v1713, 1.0
        %v1817 = vadd.f32 %v1715, 1.0
        %v1818 = vadd.f32 %v1717, 1.0
        %v1819 = vadd.f32 %v1719, 1.0
        %v1820 = vadd.f32 %v1721, 1.0
        %v1821 = vadd.f32 %v1723, 1.0
        %v1822 = vadd.f32 %v1725, 1.0
        %v1823 = vadd.f32 %v1727, 1.0
        %v1824 = vadd.f32 %v1729, 1.0
        %v1825 = vadd.f32 %v1731, 1.0
        %v1826 = vadd.f32 %v1733, 1.0
        %v1827 = vadd.f32 %v1735, 1.0
        %v1828 = vadd.f32 %v1737, 1.0
        %v1829 = vadd.f32 %v1739, 1.0
        %v1830 = vadd.f32 %v1741, 1.0
        %v1831 = vadd.f32 %v1743, 1.0
        %v1832 = vadd.f32 %v1745, 1.0
        %v1833 = vadd.f32 %v1747, 1.0
        %v1834 = vadd.f32 %v1749, 1.0
        %v1835 = vadd.f32 %v1751, 1.0
        %v1836 = vadd.f32 %v1753, 1.0
        %v1837 = vadd.f32 %v1755, 1.0
        %v1838 = vadd.f32 %v1757, 1.0
        %v1839 = vadd.f32 %v1759, 1.0
        %v1840 = vadd.f32 %v1761, 1.0
        %v1841 = vadd.f32 %v1763, 1.0
        %v1842 = vadd.f32 %v1765, 1.0
        %v1843 = vadd.f32 %v1767, 1.0
        %v1844 = vadd.f32 %v1769, 1.0
        %v1845 = vadd.f32 %v1771, 1.0
        %v1846 = vadd.f32 %v1773, 1.0
        %v1847 = vadd.f32 %v1775, 1.0
        %v1848 = vadd.f32 %v1777, 1.0
        %v1849 = vadd.f32 %v1779, 1.0
        %v1850 = vadd.f32 %v1781, 1.0
        %v1851 = vadd.f32 %v1783, 1.0
        %v1852 = vadd.f32 %v1785, 1.0
        %v1853 = vadd.f32 %v1787, 1.0
        %v1854 = vadd.f32 %v1789, 1.0
        %v1855 = vadd.f32 %v1791, 1.0
        %v1856 = vrcp.pop %v1792
        %v1857 = vmul.f32 1.0, %v1856
        %v1858 = vrcp.pop %v1793
        %v1859 = vmul.f32 1.0, %v1858
        %v1860 = vrcp.pop %v1794
        %v1861 = vmul.f32 1.0, %v1860
        %v1862 = vrcp.pop %v1795
        %v1863 = vmul.f32 1.0, %v1862
        %v1864 = vrcp.pop %v1796
        %v1865 = vmul.f32 1.0, %v1864
        %v1866 = vrcp.pop %v1797
        %v1867 = vmul.f32 1.0, %v1866
        %v1868 = vrcp.pop %v1798
        %v1869 = vmul.f32 1.0, %v1868
        %v1870 = vrcp.pop %v1799
        %v1871 = vmul.f32 1.0, %v1870
        %v1872 = vrcp.pop %v1800
        %v1873 = vmul.f32 1.0, %v1872
        %v1874 = vrcp.pop %v1801
        %v1875 = vmul.f32 1.0, %v1874
        %v1876 = vrcp.pop %v1802
        %v1877 = vmul.f32 1.0, %v1876
        %v1878 = vrcp.pop %v1803
        %v1879 = vmul.f32 1.0, %v1878
        %v1880 = vrcp.pop %v1804
        %v1881 = vmul.f32 1.0, %v1880
        %v1882 = vrcp.pop %v1805
        %v1883 = vmul.f32 1.0, %v1882
        %v1884 = vrcp.pop %v1806
        %v1885 = vmul.f32 1.0, %v1884
        %v1886 = vrcp.pop %v1807
        %v1887 = vmul.f32 1.0, %v1886
        %v1888 = vrcp.pop %v1808
        %v1889 = vmul.f32 1.0, %v1888
        %v1890 = vrcp.pop %v1809
        %v1891 = vmul.f32 1.0, %v1890
        %v1892 = vrcp.pop %v1810
        %v1893 = vmul.f32 1.0, %v1892
        %v1894 = vrcp.pop %v1811
        %v1895 = vmul.f32 1.0, %v1894
        %v1896 = vrcp.pop %v1812
        %v1897 = vmul.f32 1.0, %v1896
        %v1898 = vrcp.pop %v1813
        %v1899 = vmul.f32 1.0, %v1898
        %v1900 = vrcp.pop %v1814
        %v1901 = vmul.f32 1.0, %v1900
        %v1902 = vrcp.pop %v1815
        %v1903 = vmul.f32 1.0, %v1902
        %v1904 = vrcp.pop %v1816
        %v1905 = vmul.f32 1.0, %v1904
        %v1906 = vrcp.pop %v1817
        %v1907 = vmul.f32 1.0, %v1906
        %v1908 = vrcp.pop %v1818
        %v1909 = vmul.f32 1.0, %v1908
        %v1910 = vrcp.pop %v1819
        %v1911 = vmul.f32 1.0, %v1910
        %v1912 = vrcp.pop %v1820
        %v1913 = vmul.f32 1.0, %v1912
        %v1914 = vrcp.pop %v1821
        %v1915 = vmul.f32 1.0, %v1914
        %v1916 = vrcp.pop %v1822
        %v1917 = vmul.f32 1.0, %v1916
        %v1918 = vrcp.pop %v1823
        %v1919 = vmul.f32 1.0, %v1918
        %v1920 = vrcp.pop %v1824
        %v1921 = vmul.f32 1.0, %v1920
        %v1922 = vrcp.pop %v1825
        %v1923 = vmul.f32 1.0, %v1922
        %v1924 = vrcp.pop %v1826
        %v1925 = vmul.f32 1.0, %v1924
        %v1926 = vrcp.pop %v1827
        %v1927 = vmul.f32 1.0, %v1926
        %v1928 = vrcp.pop %v1828
        %v1929 = vmul.f32 1.0, %v1928
        %v1930 = vrcp.pop %v1829
        %v1931 = vmul.f32 1.0, %v1930
        %v1932 = vrcp.pop %v1830
        %v1933 = vmul.f32 1.0, %v1932
        %v1934 = vrcp.pop %v1831
        %v1935 = vmul.f32 1.0, %v1934
        %v1936 = vrcp.pop %v1832
        %v1937 = vmul.f32 1.0, %v1936
        %v1938 = vrcp.pop %v1833
        %v1939 = vmul.f32 1.0, %v1938
        %v1940 = vrcp.pop %v1834
        %v1941 = vmul.f32 1.0, %v1940
        %v1942 = vrcp.pop %v1835
        %v1943 = vmul.f32 1.0, %v1942
        %v1944 = vrcp.pop %v1836
        %v1945 = vmul.f32 1.0, %v1944
        %v1946 = vrcp.pop %v1837
        %v1947 = vmul.f32 1.0, %v1946
        %v1948 = vrcp.pop %v1838
        %v1949 = vmul.f32 1.0, %v1948
        %v1950 = vrcp.pop %v1839
        %v1951 = vmul.f32 1.0, %v1950
        %v1952 = vrcp.pop %v1840
        %v1953 = vmul.f32 1.0, %v1952
        %v1954 = vrcp.pop %v1841
        %v1955 = vmul.f32 1.0, %v1954
        %v1956 = vrcp.pop %v1842
        %v1957 = vmul.f32 1.0, %v1956
        %v1958 = vrcp.pop %v1843
        %v1959 = vmul.f32 1.0, %v1958
        %v1960 = vrcp.pop %v1844
        %v1961 = vmul.f32 1.0, %v1960
        %v1962 = vrcp.pop %v1845
        %v1963 = vmul.f32 1.0, %v1962
        %v1964 = vrcp.pop %v1846
        %v1965 = vmul.f32 1.0, %v1964
        %v1966 = vrcp.pop %v1847
        %v1967 = vmul.f32 1.0, %v1966
        %v1968 = vrcp.pop %v1848
        %v1969 = vmul.f32 1.0, %v1968
        %v1970 = vrcp.pop %v1849
        %v1971 = vmul.f32 1.0, %v1970
        %v1972 = vrcp.pop %v1850
        %v1973 = vmul.f32 1.0, %v1972
        %v1974 = vrcp.pop %v1851
        %v1975 = vmul.f32 1.0, %v1974
        %v1976 = vrcp.pop %v1852
        %v1977 = vmul.f32 1.0, %v1976
        %v1978 = vrcp.pop %v1853
        %v1979 = vmul.f32 1.0, %v1978
        %v1980 = vrcp.pop %v1854
        %v1981 = vmul.f32 1.0, %v1980
        %v1982 = vrcp.pop %v1855
        %v1983 = vmul.f32 1.0, %v1982
        %1984 = vst [vmem:[%s334] sm:$0xff] %v1857
        %1985 = vst [vmem:[%s334 + $0x8] sm:$0xff] %v1859
        %1986 = vst [vmem:[%s334 + $0x10] sm:$0xff] %v1861
        %vm1987 = vcmask 949248
        %1988 = vst.msk [vmem:[%s334 + $0x18] sm:$0xff] %vm1987, %v1863
        %1989 = vst [vmem:[%s334 + $0x20] sm:$0xff] %v1865
        %1990 = vst [vmem:[%s334 + $0x28] sm:$0xff] %v1867
        %1991 = vst [vmem:[%s334 + $0x30] sm:$0xff] %v1869
        %1992 = vst.msk [vmem:[%s334 + $0x38] sm:$0xff] %vm1987, %v1871
        %1993 = vst [vmem:[%s334 + $0x40] sm:$0xff] %v1873
        %1994 = vst [vmem:[%s334 + $0x48] sm:$0xff] %v1875
        %1995 = vst [vmem:[%s334 + $0x50] sm:$0xff] %v1877
        %1996 = vst.msk [vmem:[%s334 + $0x58] sm:$0xff] %vm1987, %v1879
        %1997 = vst [vmem:[%s334 + $0x60] sm:$0xff] %v1881
        %1998 = vst [vmem:[%s334 + $0x68] sm:$0xff] %v1883
        %1999 = vst [vmem:[%s334 + $0x70] sm:$0xff] %v1885
        %2000 = vst.msk [vmem:[%s334 + $0x78] sm:$0xff] %vm1987, %v1887
        %2001 = vst [vmem:[%s334 + $0x80] sm:$0xff] %v1889
        %2002 = vst [vmem:[%s334 + $0x88] sm:$0xff] %v1891
        %2003 = vst [vmem:[%s334 + $0x90] sm:$0xff] %v1893
        %2004 = vst.msk [vmem:[%s334 + $0x98] sm:$0xff] %vm1987, %v1895
        %2005 = vst [vmem:[%s334 + $0xa0] sm:$0xff] %v1897
        %2006 = vst [vmem:[%s334 + $0xa8] sm:$0xff] %v1899
        %2007 = vst [vmem:[%s334 + $0xb0] sm:$0xff] %v1901
        %2008 = vst.msk [vmem:[%s334 + $0xb8] sm:$0xff] %vm1987, %v1903
        %2009 = vst [vmem:[%s334 + $0xc0] sm:$0xff] %v1905
        %2010 = vst [vmem:[%s334 + $0xc8] sm:$0xff] %v1907
        %2011 = vst [vmem:[%s334 + $0xd0] sm:$0xff] %v1909
        %2012 = vst.msk [vmem:[%s334 + $0xd8] sm:$0xff] %vm1987, %v1911
        %2013 = vst [vmem:[%s334 + $0xe0] sm:$0xff] %v1913
        %2014 = vst [vmem:[%s334 + $0xe8] sm:$0xff] %v1915
        %2015 = vst [vmem:[%s334 + $0xf0] sm:$0xff] %v1917
        %2016 = vst.msk [vmem:[%s334 + $0xf8] sm:$0xff] %vm1987, %v1919
        %2017 = vst [vmem:[%s334 + $0x100] sm:$0xff] %v1921
        %2018 = vst [vmem:[%s334 + $0x108] sm:$0xff] %v1923
        %2019 = vst [vmem:[%s334 + $0x110] sm:$0xff] %v1925
        %2020 = vst.msk [vmem:[%s334 + $0x118] sm:$0xff] %vm1987, %v1927
        %2021 = vst [vmem:[%s334 + $0x120] sm:$0xff] %v1929
        %2022 = vst [vmem:[%s334 + $0x128] sm:$0xff] %v1931
        %2023 = vst [vmem:[%s334 + $0x130] sm:$0xff] %v1933
        %2024 = vst.msk [vmem:[%s334 + $0x138] sm:$0xff] %vm1987, %v1935
        %2025 = vst [vmem:[%s334 + $0x140] sm:$0xff] %v1937
        %2026 = vst [vmem:[%s334 + $0x148] sm:$0xff] %v1939
        %2027 = vst [vmem:[%s334 + $0x150] sm:$0xff] %v1941
        %2028 = vst.msk [vmem:[%s334 + $0x158] sm:$0xff] %vm1987, %v1943
        %2029 = vst [vmem:[%s334 + $0x160] sm:$0xff] %v1945
        %2030 = vst [vmem:[%s334 + $0x168] sm:$0xff] %v1947
        %2031 = vst [vmem:[%s334 + $0x170] sm:$0xff] %v1949
        %2032 = vst.msk [vmem:[%s334 + $0x178] sm:$0xff] %vm1987, %v1951
        %2033 = vst [vmem:[%s334 + $0x180] sm:$0xff] %v1953
        %2034 = vst [vmem:[%s334 + $0x188] sm:$0xff] %v1955
        %2035 = vst [vmem:[%s334 + $0x190] sm:$0xff] %v1957
        %2036 = vst.msk [vmem:[%s334 + $0x198] sm:$0xff] %vm1987, %v1959
        %2037 = vst [vmem:[%s334 + $0x1a0] sm:$0xff] %v1961
        %2038 = vst [vmem:[%s334 + $0x1a8] sm:$0xff] %v1963
        %2039 = vst [vmem:[%s334 + $0x1b0] sm:$0xff] %v1965
        %2040 = vst.msk [vmem:[%s334 + $0x1b8] sm:$0xff] %vm1987, %v1967
        %2041 = vst [vmem:[%s334 + $0x1c0] sm:$0xff] %v1969
        %2042 = vst [vmem:[%s334 + $0x1c8] sm:$0xff] %v1971
        %2043 = vst [vmem:[%s334 + $0x1d0] sm:$0xff] %v1973
        %2044 = vst.msk [vmem:[%s334 + $0x1d8] sm:$0xff] %vm1987, %v1975
        %2045 = vst [vmem:[%s334 + $0x1e0] sm:$0xff] %v1977
        %2046 = vst [vmem:[%s334 + $0x1e8] sm:$0xff] %v1979
        %2047 = vst [vmem:[%s334 + $0x1f0] sm:$0xff] %v1981
        %2048 = vst.msk [vmem:[%s334 + $0x1f8] sm:$0xff] %vm1987, %v1983
      $region60: #{autoencoder_forward.1} parent=43 // pred_fallthru
        _
      %s2049 = smul.u32 %s24, %s23
      %s2050 = smul.u32 16, %s2049
      %p2051 = scmp.lt.s32.totalorder %s2050, 31
      %s2052 = scalar_select %p2051, %s2050, 31
      %s2053 = smul.addr %s2052, 8
      %s2054 = scalar_lea.vmem %s6, %s2053
      %s2055 = smul.u32 %s24, %s23
      %s2056 = smul.u32 16, %s2055
      %p2057 = scmp.lt.s32.totalorder %s2056, 31
      %s2058 = scalar_select %p2057, %s2056, 31
      %s2059 = smul.addr %s2058, 4
      %s2060 = smul.addr %s2059, 8
      %s2061 = scalar_lea.vmem %s7, %s2060
      // Predicated region
      $region61: #{autoencoder_forward.1} parent=43 // pred_check
        %p2062 = pneg %p186
      $region62: #{autoencoder_forward.1} parent=43 // pred_check_branch
        %2064 = sbr.rel (%p2062) target = $region64
      $region63: #{autoencoder_forward.1} parent=43 // pred_region
        %s2065 = smul.u32 %s24, %s23
        %s2066 = smul.u32 16, %s2065
      $region64: #{autoencoder_forward.1} parent=43 // pred_fallthru
        _
      // Predicated region
      $region65: #{autoencoder_forward.1} parent=43 // pred_check
        %p2067 = pneg %p214
      $region66: #{autoencoder_forward.1} parent=43 // pred_check_branch
        %2069 = sbr.rel (%p2067) target = $region68
      $region67: #{autoencoder_forward.1} parent=43 // pred_region
        %s2070 = smul.u32 %s24, %s23
        %s2071 = smul.u32 16, %s2070
      $region68: #{autoencoder_forward.1} parent=43 // pred_fallthru
        _
    $region44: #{autoencoder_forward.1} parent=5 // pred_fallthru
      _
    %p2072 = scmp.le.s32.totalorder 2, %s14
    // Predicated region
    $region69: #{autoencoder_forward.1} parent=5 // pred_check
      %p2073 = pneg %p2072
    $region70: #{autoencoder_forward.1} parent=5 // pred_check_branch
      %2075 = sbr.rel (%p2073) target = $region72
    $region71: #{autoencoder_forward.1} parent=5 // pred_region
      %s2076 = ssub.s32 %s14, 2
      // Predicated region
      $region73: #{autoencoder_forward.1} parent=71 // pred_check
        %p2077 = pneg %p192
      $region74: #{autoencoder_forward.1} parent=71 // pred_check_branch
        %2079 = sbr.rel (%p2077) target = $region76
      $region75: #{autoencoder_forward.1} parent=71 // pred_region
        %s2080 = smul.u32 %s26, %s25
        %s2081 = smul.u32 16, %s2080
        %p2082 = scmp.lt.s32.totalorder %s2081, 31
        %s2083 = scalar_select %p2082, %s2081, 31
        %s2084 = smul.addr %s2083, 8
        %s2085 = scalar_lea.vmem %s6, %s2084
      $region76: #{autoencoder_forward.1} parent=71 // pred_fallthru
        _
      // Predicated region
      $region77: #{autoencoder_forward.1} parent=71 // pred_check
        %p2086 = pneg %p220
      $region78: #{autoencoder_forward.1} parent=71 // pred_check_branch
        %2088 = sbr.rel (%p2086) target = $region80
      $region79: #{autoencoder_forward.1} parent=71 // pred_region
        %s2089 = smul.u32 %s26, %s25
        %s2090 = smul.u32 16, %s2089
        %p2091 = scmp.lt.s32.totalorder %s2090, 31
        %s2092 = scalar_select %p2091, %s2090, 31
        %s2093 = smul.addr %s2092, 4
        %s2094 = smul.addr %s2093, 8
        %s2095 = scalar_lea.vmem %s7, %s2094
      $region80: #{autoencoder_forward.1} parent=71 // pred_fallthru
        _
    $region72: #{autoencoder_forward.1} parent=5 // pred_fallthru
      _
  $region6: #{autoencoder_forward.1} parent=0 // loop_footer
    %s18 = sadd.s32 1, %s14
  $region7: #{autoencoder_forward.1} parent=0 // loop_footer_branch
    %13 = sbr.rel target = $region3
  $region8: #{autoencoder_forward.1} parent=0 // loop_exit
    _

</llo_original>
